<compile_context>
chip_gen: v7x
topology: tpu7x:2x2x1
jax: 0.10.0
libtpu: 0.0.40
codegen_flags: <defaults>
</compile_context>

<pallas_src>
import jax
import jax.numpy as jnp
from jax.experimental import pallas as pl
from jax.experimental.pallas import tpu as pltpu

EPS = 1e-5
NEG_SLOPE = 0.2


def _lrelu(v):
    return jnp.where(v >= 0, v, NEG_SLOPE * v)


def _stacked_weight(w_hwio, W):
    """(3, 3, Ci, Co) -> (3*2*W*Ci, 2*W*Co) fused-tap banded weight.

    Folds (a) the kw taps + W-edge zero padding, (b) the 2-row H fold
    (lane = s*W*C + w*C + c), and (c) the 3 kh taps (stacked along K) of a
    3x3 / pad-1 / stride-1 conv into a single matmul weight.
    """
    KH, KW, Ci, Co = w_hwio.shape
    wb = []
    for kh in range(KH):
        b = jnp.zeros((W * Ci, W * Co), jnp.float32)
        for kw in range(KW):
            # w_in = w_out + kw - 1
            b = b + jnp.kron(jnp.eye(W, k=1 - kw, dtype=jnp.float32),
                             w_hwio[kh, kw].astype(jnp.float32))
        wb.append(b)
    z = jnp.zeros_like(wb[0])
    # Block rows: input sub-row (even/odd H row of the padded super-row);
    # block cols: output sub-row.  Padded super-row p holds rows 2p-2, 2p-1.
    b0 = jnp.block([[z, z], [wb[0], z]])              # padded super-row r
    b1 = jnp.block([[wb[1], wb[0]], [wb[2], wb[1]]])  # padded super-row r+1
    b2 = jnp.block([[z, wb[2]], [z, z]])              # padded super-row r+2
    return jnp.concatenate([b0, b1, b2], axis=0)


@jax.jit
def residual_block_encoder(x_nchw, w1_oihw, g1, b1, w2_oihw, g2, b2):
    """Pallas implementation of ResidualBlockEncoder.forward (downsample=False)."""
    x_nchw = x_nchw.astype(jnp.float32)
    N, Cin, H, W = x_nchw.shape
    C = w1_oihw.shape[0]
    assert C == Cin, "downsample=False implies output_channels == input_channels"
    assert H % 2 == 0
    assert (2 * W) & (2 * W - 1) == 0, "2*W must be a power of two (roll fold)"
    H2 = H // 2
    L = 2 * W * C            # lane width of the folded layout (128 at test size)
    L3 = 3 * L               # fused-tap contraction depth
    cnt = float(N * H * W)   # per-channel BN count

    # ---- batch tile size: amortize step overhead, keep VMEM in budget ----
    def _pick_nb():
        nb = 1
        for d in range(1, N + 1):
            if N % d:
                continue
            if d * H2 > 512:
                break
            tile_bytes = d * ((H2 + 2) * L * 2 * 3 + H2 * L * 4 * 4)
            if tile_bytes <= 16 * 1024 * 1024:
                nb = d
        return nb

    NB = _pick_nb()
    NT = N // NB

    # ---------------- layout glue (outside the hot path) ----------------
    x_nhwc = jnp.transpose(x_nchw, (0, 2, 3, 1))                   # (N,H,W,C)
    x_fold = x_nhwc.reshape(N * H2, L)                             # residual, f32
    xp = jnp.pad(x_nhwc, ((0, 0), (2, 2), (0, 0), (0, 0)))         # H halo (2 rows/side)
    xp_fold = xp.reshape(N, H2 + 2, L).astype(jnp.bfloat16)        # bf16 MXU operand

    w1s = _stacked_weight(jnp.transpose(w1_oihw, (2, 3, 1, 0)), W).astype(jnp.bfloat16)
    w2s = _stacked_weight(jnp.transpose(w2_oihw, (2, 3, 1, 0)), W).astype(jnp.bfloat16)

    # BN affine params pre-tiled onto the folded lane axis (lane l -> channel l % C).
    g1l = jnp.tile(g1.reshape(1, C).astype(jnp.float32), (1, 2 * W))
    b1l = jnp.tile(b1.reshape(1, C).astype(jnp.float32), (1, 2 * W))
    g2l = jnp.tile(g2.reshape(1, C).astype(jnp.float32), (1, 2 * W))
    b2l = jnp.tile(b2.reshape(1, C).astype(jnp.float32), (1, 2 * W))

    # ----------------------- shared kernel helpers ----------------------
    def _stack_from_ref(src_ref):
        """(NB, H2+2, L) ref -> (NB*H2, 3L) fused-tap operand."""
        parts = []
        for bb in range(NB):
            parts.append(jnp.concatenate(
                [src_ref[bb, 0:H2, :],
                 src_ref[bb, 1:H2 + 1, :],
                 src_ref[bb, 2:H2 + 2, :]], axis=-1))
        return jnp.concatenate(parts, axis=0)

    def _conv(src_ref, w_ref):
        # single K = 3L matmul, bf16 operands, f32 accumulate
        return jnp.dot(_stack_from_ref(src_ref), w_ref[...],
                       preferred_element_type=jnp.float32)        # (NB*H2, L)

    def _conv2(y1, w_ref, y1p_ref):
        # y1: (NB*H2, L) f32 (already bn1+lrelu); pad only the 2 halo rows.
        y1p_ref[:, 0:1, :] = jnp.zeros((NB, 1, L), y1p_ref.dtype)
        y1p_ref[:, H2 + 1:H2 + 2, :] = jnp.zeros((NB, 1, L), y1p_ref.dtype)
        y1p_ref[:, 1:H2 + 1, :] = y1.astype(y1p_ref.dtype).reshape(NB, H2, L)
        return _conv(y1p_ref, w_ref)

    def _bn_apply(z, ab_ref):
        return z * ab_ref[0:1, :] + ab_ref[1:2, :]

    def _finalize(s_ref, g_ref, b_ref, ab_ref):
        # Cyclic lane all-reduce over the 2W lanes of each channel (XLU rolls),
        # then fold BN scale/shift into per-lane a, b'.
        s = s_ref[...]                                   # (2, L): [sum; sumsq]
        k = C
        while k < L:
            s = s + pltpu.roll(s, shift=k, axis=1)
            k *= 2
        mean = s[0:1, :] / cnt
        var = s[1:2, :] / cnt - mean * mean              # biased (train-mode) var
        a = g_ref[...] * jax.lax.rsqrt(var + EPS)        # EUP rsqrt
        ab_ref[0:1, :] = a
        ab_ref[1:2, :] = b_ref[...] - mean * a

    # ------------------ call 1: streaming BN statistics ------------------
    def stats_kernel(xp_ref, w1_ref, w2_ref, g1_ref, b1_ref, g2_ref, b2_ref,
                     ab1_ref, ab2_ref, s1_ref, s2_ref, y1p_ref):
        p = pl.program_id(0)                 # 0: bn1 stats, 1: bn2 stats
        n = pl.program_id(1)                 # batch tile
        last = pl.num_programs(1) - 1

        def _acc(s_ref, z):
            s_ref[0:1, :] += jnp.sum(z, axis=0, keepdims=True)
            s_ref[1:2, :] += jnp.sum(z * z, axis=0, keepdims=True)

        @pl.when(p == 0)
        def _phase0():
            @pl.when(n == 0)
            def _():
                s1_ref[...] = jnp.zeros_like(s1_ref)
            _acc(s1_ref, _conv(xp_ref, w1_ref))
            @pl.when(n == last)
            def _():
                _finalize(s1_ref, g1_ref, b1_ref, ab1_ref)

        @pl.when(p == 1)
        def _phase1():
            @pl.when(n == 0)
            def _():
                s2_ref[...] = jnp.zeros_like(s2_ref)
            y1 = _lrelu(_bn_apply(_conv(xp_ref, w1_ref), ab1_ref))
            _acc(s2_ref, _conv2(y1, w2_ref, y1p_ref))
            @pl.when(n == last)
            def _():
                _finalize(s2_ref, g2_ref, b2_ref, ab2_ref)

    const2 = lambda p, n: (0, 0)
    per_n3 = lambda p, n: (n, 0, 0)

    ab1, ab2 = pl.pallas_call(
        stats_kernel,
        out_shape=(jax.ShapeDtypeStruct((2, L), jnp.float32),
                   jax.ShapeDtypeStruct((2, L), jnp.float32)),
        grid=(2, NT),
        in_specs=[
            pl.BlockSpec((NB, H2 + 2, L), per_n3),     # xp (bf16, H-padded, folded)
            pl.BlockSpec((L3, L), const2),             # fused conv1 weight
            pl.BlockSpec((L3, L), const2),             # fused conv2 weight
            pl.BlockSpec((1, L), const2),              # gamma1 (lane tiled)
            pl.BlockSpec((1, L), const2),              # beta1
            pl.BlockSpec((1, L), const2),              # gamma2
            pl.BlockSpec((1, L), const2),              # beta2
        ],
        out_specs=(pl.BlockSpec((2, L), const2),       # fused bn1 a / b'
                   pl.BlockSpec((2, L), const2)),      # fused bn2 a / b'
        scratch_shapes=[
            pltpu.VMEM((2, L), jnp.float32),           # bn1 sum / sumsq
            pltpu.VMEM((2, L), jnp.float32),           # bn2 sum / sumsq
            pltpu.VMEM((NB, H2 + 2, L), jnp.bfloat16), # H-padded y1 tile
        ],
        compiler_params=pltpu.CompilerParams(
            dimension_semantics=("arbitrary", "arbitrary"),
            vmem_limit_bytes=32 * 1024 * 1024),
    )(xp_fold, w1s, w2s, g1l, b1l, g2l, b2l)

    # --------------- call 2: output pass (batch-parallel) ----------------
    def out_kernel(xp_ref, x_ref, w1_ref, w2_ref, ab1_ref, ab2_ref,
                   out_ref, y1p_ref):
        y1 = _lrelu(_bn_apply(_conv(xp_ref, w1_ref), ab1_ref))
        y2 = _bn_apply(_conv2(y1, w2_ref, y1p_ref), ab2_ref)
        out_ref[...] = _lrelu(y2 + x_ref[...]).astype(out_ref.dtype)

    out = pl.pallas_call(
        out_kernel,
        out_shape=jax.ShapeDtypeStruct((N * H2, L), jnp.float32),
        grid=(NT,),
        in_specs=[
            pl.BlockSpec((NB, H2 + 2, L), lambda n: (n, 0, 0)),  # xp
            pl.BlockSpec((NB * H2, L), lambda n: (n, 0)),        # residual x
            pl.BlockSpec((L3, L), lambda n: (0, 0)),             # conv1 weight
            pl.BlockSpec((L3, L), lambda n: (0, 0)),             # conv2 weight
            pl.BlockSpec((2, L), lambda n: (0, 0)),              # bn1 a / b'
            pl.BlockSpec((2, L), lambda n: (0, 0)),              # bn2 a / b'
        ],
        out_specs=pl.BlockSpec((NB * H2, L), lambda n: (n, 0)),
        scratch_shapes=[pltpu.VMEM((NB, H2 + 2, L), jnp.bfloat16)],
        compiler_params=pltpu.CompilerParams(
            dimension_semantics=("parallel",),
            vmem_limit_bytes=32 * 1024 * 1024),
    )(xp_fold, x_fold, w1s, w2s, ab1, ab2)

    # glue: (N*H/2, 2*W*C) -> NCHW
    return jnp.transpose(out.reshape(N, H, W, C), (0, 3, 1, 2))


def reference_forward(x_nchw, w1, g1, b1, w2, g2, b2):
    """Pure-JAX f32 reference mirroring the PyTorch module (train-mode BN)."""
    def conv(x, w):
        return jax.lax.conv_general_dilated(
            x, w, window_strides=(1, 1), padding=((1, 1), (1, 1)),
            dimension_numbers=("NCHW", "OIHW", "NCHW"))

    def bn(y, g, b):
        mean = jnp.mean(y, axis=(0, 2, 3), keepdims=True)
        var = jnp.mean((y - mean) ** 2, axis=(0, 2, 3), keepdims=True)
        return ((y - mean) * jax.lax.rsqrt(var + EPS)
                * g.reshape(1, -1, 1, 1) + b.reshape(1, -1, 1, 1))

    y = _lrelu(bn(conv(x_nchw, w1), g1, b1))
    y = bn(conv(y, w2), g2, b2)
    return _lrelu(y + x_nchw)


if __name__ == "__main__":
    key = jax.random.PRNGKey(0)
    k_x, k_w1, k_w2, k_g1, k_b1, k_g2, k_b2 = jax.random.split(key, 7)

    N, Cin, H, W = 2, 4, 16, 16      # downsample=False => Cout = Cin
    C = Cin

    x = jax.random.normal(k_x, (N, Cin, H, W), jnp.float32)
    w1 = jax.random.normal(k_w1, (C, Cin, 3, 3), jnp.float32) * 0.2
    w2 = jax.random.normal(k_w2, (C, C, 3, 3), jnp.float32) * 0.2
    g1 = 1.0 + 0.1 * jax.random.normal(k_g1, (C,), jnp.float32)
    b1 = 0.1 * jax.random.normal(k_b1, (C,), jnp.float32)
    g2 = 1.0 + 0.1 * jax.random.normal(k_g2, (C,), jnp.float32)
    b2 = 0.1 * jax.random.normal(k_b2, (C,), jnp.float32)

    out = residual_block_encoder(x, w1, g1, b1, w2, g2, b2)
    out = jax.block_until_ready(out)

    ref = reference_forward(x, w1, g1, b1, w2, g2, b2)
    assert out.shape == (N, C, H, W)
    # bf16 MXU operands + one-pass variance => looser tolerance than pure f32.
    max_err = float(jnp.max(jnp.abs(out - ref)))
    assert jnp.allclose(out, ref, atol=5e-2, rtol=5e-2), max_err

    print("KERNEL_OK")
</pallas_src>

<mosaic_0001>
module attributes {stable_mosaic.version = 11 : i64} {
  func.func @stats_kernel(%arg0: i32, %arg1: i32, %arg2: memref<2x10x128xbf16, #tpu.memory_space<vmem>>, %arg3: memref<384x128xbf16, #tpu.memory_space<vmem>>, %arg4: memref<384x128xbf16, #tpu.memory_space<vmem>>, %arg5: memref<1x128xf32, #tpu.memory_space<vmem>>, %arg6: memref<1x128xf32, #tpu.memory_space<vmem>>, %arg7: memref<1x128xf32, #tpu.memory_space<vmem>>, %arg8: memref<1x128xf32, #tpu.memory_space<vmem>>, %arg9: memref<2x128xf32, #tpu.memory_space<vmem>>, %arg10: memref<2x128xf32, #tpu.memory_space<vmem>>, %arg11: memref<2x128xf32, #tpu.memory_space<vmem>>, %arg12: memref<2x128xf32, #tpu.memory_space<vmem>>, %arg13: memref<2x10x128xbf16, #tpu.memory_space<vmem>>) attributes {dimension_semantics = [#tpu.dimension_semantics<arbitrary>, #tpu.dimension_semantics<arbitrary>], iteration_bounds = array<i64: 2, 1>, scalar_prefetch = 0 : i64, scratch_operands = 3 : i64, tpu.core_type = #tpu.core_type<tc>, window_params = [{transform_indices = @transform_0, window_bounds = array<i64: 2, 10, 128>}, {pipeline_mode = #tpu.pipeline_mode<synchronous>, transform_indices = @transform_1, window_bounds = array<i64: 384, 128>}, {pipeline_mode = #tpu.pipeline_mode<synchronous>, transform_indices = @transform_2, window_bounds = array<i64: 384, 128>}, {pipeline_mode = #tpu.pipeline_mode<synchronous>, transform_indices = @transform_3, window_bounds = array<i64: 1, 128>}, {pipeline_mode = #tpu.pipeline_mode<synchronous>, transform_indices = @transform_4, window_bounds = array<i64: 1, 128>}, {pipeline_mode = #tpu.pipeline_mode<synchronous>, transform_indices = @transform_5, window_bounds = array<i64: 1, 128>}, {pipeline_mode = #tpu.pipeline_mode<synchronous>, transform_indices = @transform_6, window_bounds = array<i64: 1, 128>}, {pipeline_mode = #tpu.pipeline_mode<synchronous>, transform_indices = @transform_7, window_bounds = array<i64: 2, 128>}, {pipeline_mode = #tpu.pipeline_mode<synchronous>, transform_indices = @transform_8, window_bounds = array<i64: 2, 128>}]} {
    %c0_i32 = arith.constant 0 : i32
    %0 = arith.cmpi eq, %arg0, %c0_i32 : i32
    %1 = arith.extui %0 : i1 to i32
    %c0_i32_0 = arith.constant 0 : i32
    %2 = arith.cmpi ne, %1, %c0_i32_0 : i32
    scf.if %2 {
      %c0_i32_2 = arith.constant 0 : i32
      %6 = arith.cmpi eq, %arg1, %c0_i32_2 : i32
      %7 = arith.extui %6 : i1 to i32
      %c0_i32_3 = arith.constant 0 : i32
      %8 = arith.cmpi ne, %7, %c0_i32_3 : i32
      scf.if %8 {
        %cst_33 = arith.constant 0.000000e+00 : f32
        %40 = vector.broadcast %cst_33 : f32 to vector<2x128xf32>
        %c0_34 = arith.constant 0 : index
        %c0_35 = arith.constant 0 : index
        %41 = vector.load %arg11[%c0_34, %c0_35] : memref<2x128xf32, #tpu.memory_space<vmem>>, vector<2x128xf32>
        tpu.vector_store %arg11[%c0_34, %c0_35], %40 {strides = array<i32>} : memref<2x128xf32, #tpu.memory_space<vmem>>, vector<2x128xf32>,
      } else {
      }
      %c0 = arith.constant 0 : index
      %c0_4 = arith.constant 0 : index
      %c0_5 = arith.constant 0 : index
      %9 = vector.load %arg2[%c0, %c0_4, %c0_5] : memref<2x10x128xbf16, #tpu.memory_space<vmem>>, vector<1x8x128xbf16>
      %10 = vector.shape_cast %9 : vector<1x8x128xbf16> to vector<8x128xbf16>
      %c0_6 = arith.constant 0 : index
      %c1 = arith.constant 1 : index
      %c0_7 = arith.constant 0 : index
      %11 = vector.load %arg2[%c0_6, %c1, %c0_7] : memref<2x10x128xbf16, #tpu.memory_space<vmem>>, vector<1x8x128xbf16>
      %12 = vector.shape_cast %11 : vector<1x8x128xbf16> to vector<8x128xbf16>
      %c0_8 = arith.constant 0 : index
      %c2 = arith.constant 2 : index
      %c0_9 = arith.constant 0 : index
      %13 = vector.load %arg2[%c0_8, %c2, %c0_9] : memref<2x10x128xbf16, #tpu.memory_space<vmem>>, vector<1x8x128xbf16>
      %14 = vector.shape_cast %13 : vector<1x8x128xbf16> to vector<8x128xbf16>
      %15 = tpu.concatenate %10, %12, %14 in 1 : vector<8x128xbf16>, vector<8x128xbf16>, vector<8x128xbf16> -> vector<8x384xbf16>
      %c1_10 = arith.constant 1 : index
      %c0_11 = arith.constant 0 : index
      %c0_12 = arith.constant 0 : index
      %16 = vector.load %arg2[%c1_10, %c0_11, %c0_12] : memref<2x10x128xbf16, #tpu.memory_space<vmem>>, vector<1x8x128xbf16>
      %17 = vector.shape_cast %16 : vector<1x8x128xbf16> to vector<8x128xbf16>
      %c1_13 = arith.constant 1 : index
      %c1_14 = arith.constant 1 : index
      %c0_15 = arith.constant 0 : index
      %18 = vector.load %arg2[%c1_13, %c1_14, %c0_15] : memref<2x10x128xbf16, #tpu.memory_space<vmem>>, vector<1x8x128xbf16>
      %19 = vector.shape_cast %18 : vector<1x8x128xbf16> to vector<8x128xbf16>
      %c1_16 = arith.constant 1 : index
      %c2_17 = arith.constant 2 : index
      %c0_18 = arith.constant 0 : index
      %20 = vector.load %arg2[%c1_16, %c2_17, %c0_18] : memref<2x10x128xbf16, #tpu.memory_space<vmem>>, vector<1x8x128xbf16>
      %21 = vector.shape_cast %20 : vector<1x8x128xbf16> to vector<8x128xbf16>
      %22 = tpu.concatenate %17, %19, %21 in 1 : vector<8x128xbf16>, vector<8x128xbf16>, vector<8x128xbf16> -> vector<8x384xbf16>
      %23 = tpu.concatenate %15, %22 in 0 : vector<8x384xbf16>, vector<8x384xbf16> -> vector<16x384xbf16>
      %c0_19 = arith.constant 0 : index
      %c0_20 = arith.constant 0 : index
      %24 = vector.load %arg3[%c0_19, %c0_20] : memref<384x128xbf16, #tpu.memory_space<vmem>>, vector<384x128xbf16>
      %cst = arith.constant dense<0.000000e+00> : vector<16x128xf32>
      %25 = tpu.matmul %23, %24, %cst {dimension_numbers = #tpu.dot_dimension_numbers<[1], [0], [0], [1], [0, 0, 1, 1], [], []>} : vector<16x384xbf16>, vector<384x128xbf16>, vector<16x128xf32> -> vector<16x128xf32>
      %c0_21 = arith.constant 0 : index
      %c0_22 = arith.constant 0 : index
      %26 = vector.load %arg11[%c0_21, %c0_22] : memref<2x128xf32, #tpu.memory_space<vmem>>, vector<1x128xf32>
      %cst_23 = arith.constant dense<0.000000e+00> : vector<128xf32>
      %27 = vector.multi_reduction <add>, %25, %cst_23 [0] : vector<16x128xf32> to vector<128xf32>
      %28 = vector.shape_cast %27 : vector<128xf32> to vector<1x128xf32>
      %29 = arith.addf %26, %28 : vector<1x128xf32>
      %c0_24 = arith.constant 0 : index
      %c0_25 = arith.constant 0 : index
      %30 = vector.load %arg11[%c0_24, %c0_25] : memref<2x128xf32, #tpu.memory_space<vmem>>, vector<1x128xf32>
      tpu.vector_store %arg11[%c0_24, %c0_25], %29 {strides = array<i32>} : memref<2x128xf32, #tpu.memory_space<vmem>>, vector<1x128xf32>,
      %c1_26 = arith.constant 1 : index
      %c0_27 = arith.constant 0 : index
      %31 = vector.load %arg11[%c1_26, %c0_27] : memref<2x128xf32, #tpu.memory_space<vmem>>, vector<1x128xf32>
      %32 = arith.mulf %25, %25 : vector<16x128xf32>
      %cst_28 = arith.constant dense<0.000000e+00> : vector<128xf32>
      %33 = vector.multi_reduction <add>, %32, %cst_28 [0] : vector<16x128xf32> to vector<128xf32>
      %34 = vector.shape_cast %33 : vector<128xf32> to vector<1x128xf32>
      %35 = arith.addf %31, %34 : vector<1x128xf32>
      %c1_29 = arith.constant 1 : index
      %c0_30 = arith.constant 0 : index
      %36 = vector.load %arg11[%c1_29, %c0_30] : memref<2x128xf32, #tpu.memory_space<vmem>>, vector<1x128xf32>
      tpu.vector_store %arg11[%c1_29, %c0_30], %35 {strides = array<i32>} : memref<2x128xf32, #tpu.memory_space<vmem>>, vector<1x128xf32>,
      %c0_i32_31 = arith.constant 0 : i32
      %37 = arith.cmpi eq, %arg1, %c0_i32_31 : i32
      %38 = arith.extui %37 : i1 to i32
      %c0_i32_32 = arith.constant 0 : i32
      %39 = arith.cmpi ne, %38, %c0_i32_32 : i32
      scf.if %39 {
        %c0_33 = arith.constant 0 : index
        %c0_34 = arith.constant 0 : index
        %40 = vector.load %arg11[%c0_33, %c0_34] : memref<2x128xf32, #tpu.memory_space<vmem>>, vector<2x128xf32>
        %c4_i32 = arith.constant 4 : i32
        %41 = tpu.dynamic_rotate %40 by %c4_i32 dim 1 : vector<2x128xf32>, i32 -> vector<2x128xf32>
        %42 = arith.addf %40, %41 : vector<2x128xf32>
        %c8_i32 = arith.constant 8 : i32
        %43 = tpu.dynamic_rotate %42 by %c8_i32 dim 1 : vector<2x128xf32>, i32 -> vector<2x128xf32>
        %44 = arith.addf %42, %43 : vector<2x128xf32>
        %c16_i32 = arith.constant 16 : i32
        %45 = tpu.dynamic_rotate %44 by %c16_i32 dim 1 : vector<2x128xf32>, i32 -> vector<2x128xf32>
        %46 = arith.addf %44, %45 : vector<2x128xf32>
        %c32_i32 = arith.constant 32 : i32
        %47 = tpu.dynamic_rotate %46 by %c32_i32 dim 1 : vector<2x128xf32>, i32 -> vector<2x128xf32>
        %48 = arith.addf %46, %47 : vector<2x128xf32>
        %c64_i32 = arith.constant 64 : i32
        %49 = tpu.dynamic_rotate %48 by %c64_i32 dim 1 : vector<2x128xf32>, i32 -> vector<2x128xf32>
        %50 = arith.addf %48, %49 : vector<2x128xf32>
        %51 = vector.extract_strided_slice %50 {offsets = [0, 0], sizes = [1, 128], strides = [1, 1]} : vector<2x128xf32> to vector<1x128xf32>
        %cst_35 = arith.constant 5.120000e+02 : f32
        %52 = vector.broadcast %cst_35 : f32 to vector<1x128xf32>
        %53 = arith.divf %51, %52 : vector<1x128xf32>
        %54 = vector.extract_strided_slice %50 {offsets = [1, 0], sizes = [1, 128], strides = [1, 1]} : vector<2x128xf32> to vector<1x128xf32>
        %cst_36 = arith.constant 5.120000e+02 : f32
        %55 = vector.broadcast %cst_36 : f32 to vector<1x128xf32>
        %56 = arith.divf %54, %55 : vector<1x128xf32>
        %57 = arith.mulf %53, %53 : vector<1x128xf32>
        %58 = arith.subf %56, %57 : vector<1x128xf32>
        %c0_37 = arith.constant 0 : index
        %c0_38 = arith.constant 0 : index
        %59 = vector.load %arg5[%c0_37, %c0_38] : memref<1x128xf32, #tpu.memory_space<vmem>>, vector<1x128xf32>
        %cst_39 = arith.constant 9.99999974E-6 : f32
        %60 = vector.broadcast %cst_39 : f32 to vector<1x128xf32>
        %61 = arith.addf %58, %60 : vector<1x128xf32>
        %62 = math.rsqrt %61 : vector<1x128xf32>
        %63 = arith.mulf %59, %62 : vector<1x128xf32>
        %c0_40 = arith.constant 0 : index
        %c0_41 = arith.constant 0 : index
        %64 = vector.load %arg9[%c0_40, %c0_41] : memref<2x128xf32, #tpu.memory_space<vmem>>, vector<1x128xf32>
        tpu.vector_store %arg9[%c0_40, %c0_41], %63 {strides = array<i32>} : memref<2x128xf32, #tpu.memory_space<vmem>>, vector<1x128xf32>,
        %c0_42 = arith.constant 0 : index
        %c0_43 = arith.constant 0 : index
        %65 = vector.load %arg6[%c0_42, %c0_43] : memref<1x128xf32, #tpu.memory_space<vmem>>, vector<1x128xf32>
        %66 = arith.mulf %53, %63 : vector<1x128xf32>
        %67 = arith.subf %65, %66 : vector<1x128xf32>
        %c1_44 = arith.constant 1 : index
        %c0_45 = arith.constant 0 : index
        %68 = vector.load %arg9[%c1_44, %c0_45] : memref<2x128xf32, #tpu.memory_space<vmem>>, vector<1x128xf32>
        tpu.vector_store %arg9[%c1_44, %c0_45], %67 {strides = array<i32>} : memref<2x128xf32, #tpu.memory_space<vmem>>, vector<1x128xf32>,
      } else {
      }
    } else {
    }
    %c1_i32 = arith.constant 1 : i32
    %3 = arith.cmpi eq, %arg0, %c1_i32 : i32
    %4 = arith.extui %3 : i1 to i32
    %c0_i32_1 = arith.constant 0 : i32
    %5 = arith.cmpi ne, %4, %c0_i32_1 : i32
    scf.if %5 {
      %c0_i32_2 = arith.constant 0 : i32
      %6 = arith.cmpi eq, %arg1, %c0_i32_2 : i32
      %7 = arith.extui %6 : i1 to i32
      %c0_i32_3 = arith.constant 0 : i32
      %8 = arith.cmpi ne, %7, %c0_i32_3 : i32
      scf.if %8 {
        %cst_70 = arith.constant 0.000000e+00 : f32
        %75 = vector.broadcast %cst_70 : f32 to vector<2x128xf32>
        %c0_71 = arith.constant 0 : index
        %c0_72 = arith.constant 0 : index
        %76 = vector.load %arg12[%c0_71, %c0_72] : memref<2x128xf32, #tpu.memory_space<vmem>>, vector<2x128xf32>
        tpu.vector_store %arg12[%c0_71, %c0_72], %75 {strides = array<i32>} : memref<2x128xf32, #tpu.memory_space<vmem>>, vector<2x128xf32>,
      } else {
      }
      %c0 = arith.constant 0 : index
      %c0_4 = arith.constant 0 : index
      %c0_5 = arith.constant 0 : index
      %9 = vector.load %arg2[%c0, %c0_4, %c0_5] : memref<2x10x128xbf16, #tpu.memory_space<vmem>>, vector<1x8x128xbf16>
      %10 = vector.shape_cast %9 : vector<1x8x128xbf16> to vector<8x128xbf16>
      %c0_6 = arith.constant 0 : index
      %c1 = arith.constant 1 : index
      %c0_7 = arith.constant 0 : index
      %11 = vector.load %arg2[%c0_6, %c1, %c0_7] : memref<2x10x128xbf16, #tpu.memory_space<vmem>>, vector<1x8x128xbf16>
      %12 = vector.shape_cast %11 : vector<1x8x128xbf16> to vector<8x128xbf16>
      %c0_8 = arith.constant 0 : index
      %c2 = arith.constant 2 : index
      %c0_9 = arith.constant 0 : index
      %13 = vector.load %arg2[%c0_8, %c2, %c0_9] : memref<2x10x128xbf16, #tpu.memory_space<vmem>>, vector<1x8x128xbf16>
      %14 = vector.shape_cast %13 : vector<1x8x128xbf16> to vector<8x128xbf16>
      %15 = tpu.concatenate %10, %12, %14 in 1 : vector<8x128xbf16>, vector<8x128xbf16>, vector<8x128xbf16> -> vector<8x384xbf16>
      %c1_10 = arith.constant 1 : index
      %c0_11 = arith.constant 0 : index
      %c0_12 = arith.constant 0 : index
      %16 = vector.load %arg2[%c1_10, %c0_11, %c0_12] : memref<2x10x128xbf16, #tpu.memory_space<vmem>>, vector<1x8x128xbf16>
      %17 = vector.shape_cast %16 : vector<1x8x128xbf16> to vector<8x128xbf16>
      %c1_13 = arith.constant 1 : index
      %c1_14 = arith.constant 1 : index
      %c0_15 = arith.constant 0 : index
      %18 = vector.load %arg2[%c1_13, %c1_14, %c0_15] : memref<2x10x128xbf16, #tpu.memory_space<vmem>>, vector<1x8x128xbf16>
      %19 = vector.shape_cast %18 : vector<1x8x128xbf16> to vector<8x128xbf16>
      %c1_16 = arith.constant 1 : index
      %c2_17 = arith.constant 2 : index
      %c0_18 = arith.constant 0 : index
      %20 = vector.load %arg2[%c1_16, %c2_17, %c0_18] : memref<2x10x128xbf16, #tpu.memory_space<vmem>>, vector<1x8x128xbf16>
      %21 = vector.shape_cast %20 : vector<1x8x128xbf16> to vector<8x128xbf16>
      %22 = tpu.concatenate %17, %19, %21 in 1 : vector<8x128xbf16>, vector<8x128xbf16>, vector<8x128xbf16> -> vector<8x384xbf16>
      %23 = tpu.concatenate %15, %22 in 0 : vector<8x384xbf16>, vector<8x384xbf16> -> vector<16x384xbf16>
      %c0_19 = arith.constant 0 : index
      %c0_20 = arith.constant 0 : index
      %24 = vector.load %arg3[%c0_19, %c0_20] : memref<384x128xbf16, #tpu.memory_space<vmem>>, vector<384x128xbf16>
      %cst = arith.constant dense<0.000000e+00> : vector<16x128xf32>
      %25 = tpu.matmul %23, %24, %cst {dimension_numbers = #tpu.dot_dimension_numbers<[1], [0], [0], [1], [0, 0, 1, 1], [], []>} : vector<16x384xbf16>, vector<384x128xbf16>, vector<16x128xf32> -> vector<16x128xf32>
      %c0_21 = arith.constant 0 : index
      %c0_22 = arith.constant 0 : index
      %26 = vector.load %arg9[%c0_21, %c0_22] : memref<2x128xf32, #tpu.memory_space<vmem>>, vector<1x128xf32>
      %27 = vector.broadcast %26 : vector<1x128xf32> to vector<16x128xf32>
      %28 = arith.mulf %25, %27 : vector<16x128xf32>
      %c1_23 = arith.constant 1 : index
      %c0_24 = arith.constant 0 : index
      %29 = vector.load %arg9[%c1_23, %c0_24] : memref<2x128xf32, #tpu.memory_space<vmem>>, vector<1x128xf32>
      %30 = vector.broadcast %29 : vector<1x128xf32> to vector<16x128xf32>
      %31 = arith.addf %28, %30 : vector<16x128xf32>
      %cst_25 = arith.constant 0.000000e+00 : f32
      %32 = vector.broadcast %cst_25 : f32 to vector<16x128xf32>
      %33 = arith.cmpf oge, %31, %32 : vector<16x128xf32>
      %cst_26 = arith.constant 2.000000e-01 : f32
      %34 = vector.broadcast %cst_26 : f32 to vector<16x128xf32>
      %35 = arith.mulf %34, %31 : vector<16x128xf32>
      %36 = arith.select %33, %31, %35 : vector<16x128xi1>, vector<16x128xf32>
      %cst_27 = arith.constant 0.000000e+00 : bf16
      %37 = vector.broadcast %cst_27 : bf16 to vector<2x1x128xbf16>
      %c0_28 = arith.constant 0 : index
      %c0_29 = arith.constant 0 : index
      %c0_30 = arith.constant 0 : index
      %38 = vector.load %arg13[%c0_28, %c0_29, %c0_30] : memref<2x10x128xbf16, #tpu.memory_space<vmem>>, vector<2x1x128xbf16>
      tpu.vector_store %arg13[%c0_28, %c0_29, %c0_30], %37 {strides = array<i32>} : memref<2x10x128xbf16, #tpu.memory_space<vmem>>, vector<2x1x128xbf16>,
      %cst_31 = arith.constant 0.000000e+00 : bf16
      %39 = vector.broadcast %cst_31 : bf16 to vector<2x1x128xbf16>
      %c0_32 = arith.constant 0 : index
      %c9 = arith.constant 9 : index
      %c0_33 = arith.constant 0 : index
      %40 = vector.load %arg13[%c0_32, %c9, %c0_33] : memref<2x10x128xbf16, #tpu.memory_space<vmem>>, vector<2x1x128xbf16>
      tpu.vector_store %arg13[%c0_32, %c9, %c0_33], %39 {strides = array<i32>} : memref<2x10x128xbf16, #tpu.memory_space<vmem>>, vector<2x1x128xbf16>,
      %41 = arith.truncf %36 : vector<16x128xf32> to vector<16x128xbf16>
      %42 = vector.shape_cast %41 : vector<16x128xbf16> to vector<2x8x128xbf16>
      %c0_34 = arith.constant 0 : index
      %c1_35 = arith.constant 1 : index
      %c0_36 = arith.constant 0 : index
      %43 = vector.load %arg13[%c0_34, %c1_35, %c0_36] : memref<2x10x128xbf16, #tpu.memory_space<vmem>>, vector<2x8x128xbf16>
      tpu.vector_store %arg13[%c0_34, %c1_35, %c0_36], %42 {strides = array<i32>} : memref<2x10x128xbf16, #tpu.memory_space<vmem>>, vector<2x8x128xbf16>,
      %c0_37 = arith.constant 0 : index
      %c0_38 = arith.constant 0 : index
      %c0_39 = arith.constant 0 : index
      %44 = vector.load %arg13[%c0_37, %c0_38, %c0_39] : memref<2x10x128xbf16, #tpu.memory_space<vmem>>, vector<1x8x128xbf16>
      %45 = vector.shape_cast %44 : vector<1x8x128xbf16> to vector<8x128xbf16>
      %c0_40 = arith.constant 0 : index
      %c1_41 = arith.constant 1 : index
      %c0_42 = arith.constant 0 : index
      %46 = vector.load %arg13[%c0_40, %c1_41, %c0_42] : memref<2x10x128xbf16, #tpu.memory_space<vmem>>, vector<1x8x128xbf16>
      %47 = vector.shape_cast %46 : vector<1x8x128xbf16> to vector<8x128xbf16>
      %c0_43 = arith.constant 0 : index
      %c2_44 = arith.constant 2 : index
      %c0_45 = arith.constant 0 : index
      %48 = vector.load %arg13[%c0_43, %c2_44, %c0_45] : memref<2x10x128xbf16, #tpu.memory_space<vmem>>, vector<1x8x128xbf16>
      %49 = vector.shape_cast %48 : vector<1x8x128xbf16> to vector<8x128xbf16>
      %50 = tpu.concatenate %45, %47, %49 in 1 : vector<8x128xbf16>, vector<8x128xbf16>, vector<8x128xbf16> -> vector<8x384xbf16>
      %c1_46 = arith.constant 1 : index
      %c0_47 = arith.constant 0 : index
      %c0_48 = arith.constant 0 : index
      %51 = vector.load %arg13[%c1_46, %c0_47, %c0_48] : memref<2x10x128xbf16, #tpu.memory_space<vmem>>, vector<1x8x128xbf16>
      %52 = vector.shape_cast %51 : vector<1x8x128xbf16> to vector<8x128xbf16>
      %c1_49 = arith.constant 1 : index
      %c1_50 = arith.constant 1 : index
      %c0_51 = arith.constant 0 : index
      %53 = vector.load %arg13[%c1_49, %c1_50, %c0_51] : memref<2x10x128xbf16, #tpu.memory_space<vmem>>, vector<1x8x128xbf16>
      %54 = vector.shape_cast %53 : vector<1x8x128xbf16> to vector<8x128xbf16>
      %c1_52 = arith.constant 1 : index
      %c2_53 = arith.constant 2 : index
      %c0_54 = arith.constant 0 : index
      %55 = vector.load %arg13[%c1_52, %c2_53, %c0_54] : memref<2x10x128xbf16, #tpu.memory_space<vmem>>, vector<1x8x128xbf16>
      %56 = vector.shape_cast %55 : vector<1x8x128xbf16> to vector<8x128xbf16>
      %57 = tpu.concatenate %52, %54, %56 in 1 : vector<8x128xbf16>, vector<8x128xbf16>, vector<8x128xbf16> -> vector<8x384xbf16>
      %58 = tpu.concatenate %50, %57 in 0 : vector<8x384xbf16>, vector<8x384xbf16> -> vector<16x384xbf16>
      %c0_55 = arith.constant 0 : index
      %c0_56 = arith.constant 0 : index
      %59 = vector.load %arg4[%c0_55, %c0_56] : memref<384x128xbf16, #tpu.memory_space<vmem>>, vector<384x128xbf16>
      %cst_57 = arith.constant dense<0.000000e+00> : vector<16x128xf32>
      %60 = tpu.matmul %58, %59, %cst_57 {dimension_numbers = #tpu.dot_dimension_numbers<[1], [0], [0], [1], [0, 0, 1, 1], [], []>} : vector<16x384xbf16>, vector<384x128xbf16>, vector<16x128xf32> -> vector<16x128xf32>
      %c0_58 = arith.constant 0 : index
      %c0_59 = arith.constant 0 : index
      %61 = vector.load %arg12[%c0_58, %c0_59] : memref<2x128xf32, #tpu.memory_space<vmem>>, vector<1x128xf32>
      %cst_60 = arith.constant dense<0.000000e+00> : vector<128xf32>
      %62 = vector.multi_reduction <add>, %60, %cst_60 [0] : vector<16x128xf32> to vector<128xf32>
      %63 = vector.shape_cast %62 : vector<128xf32> to vector<1x128xf32>
      %64 = arith.addf %61, %63 : vector<1x128xf32>
      %c0_61 = arith.constant 0 : index
      %c0_62 = arith.constant 0 : index
      %65 = vector.load %arg12[%c0_61, %c0_62] : memref<2x128xf32, #tpu.memory_space<vmem>>, vector<1x128xf32>
      tpu.vector_store %arg12[%c0_61, %c0_62], %64 {strides = array<i32>} : memref<2x128xf32, #tpu.memory_space<vmem>>, vector<1x128xf32>,
      %c1_63 = arith.constant 1 : index
      %c0_64 = arith.constant 0 : index
      %66 = vector.load %arg12[%c1_63, %c0_64] : memref<2x128xf32, #tpu.memory_space<vmem>>, vector<1x128xf32>
      %67 = arith.mulf %60, %60 : vector<16x128xf32>
      %cst_65 = arith.constant dense<0.000000e+00> : vector<128xf32>
      %68 = vector.multi_reduction <add>, %67, %cst_65 [0] : vector<16x128xf32> to vector<128xf32>
      %69 = vector.shape_cast %68 : vector<128xf32> to vector<1x128xf32>
      %70 = arith.addf %66, %69 : vector<1x128xf32>
      %c1_66 = arith.constant 1 : index
      %c0_67 = arith.constant 0 : index
      %71 = vector.load %arg12[%c1_66, %c0_67] : memref<2x128xf32, #tpu.memory_space<vmem>>, vector<1x128xf32>
      tpu.vector_store %arg12[%c1_66, %c0_67], %70 {strides = array<i32>} : memref<2x128xf32, #tpu.memory_space<vmem>>, vector<1x128xf32>,
      %c0_i32_68 = arith.constant 0 : i32
      %72 = arith.cmpi eq, %arg1, %c0_i32_68 : i32
      %73 = arith.extui %72 : i1 to i32
      %c0_i32_69 = arith.constant 0 : i32
      %74 = arith.cmpi ne, %73, %c0_i32_69 : i32
      scf.if %74 {
        %c0_70 = arith.constant 0 : index
        %c0_71 = arith.constant 0 : index
        %75 = vector.load %arg12[%c0_70, %c0_71] : memref<2x128xf32, #tpu.memory_space<vmem>>, vector<2x128xf32>
        %c4_i32 = arith.constant 4 : i32
        %76 = tpu.dynamic_rotate %75 by %c4_i32 dim 1 : vector<2x128xf32>, i32 -> vector<2x128xf32>
        %77 = arith.addf %75, %76 : vector<2x128xf32>
        %c8_i32 = arith.constant 8 : i32
        %78 = tpu.dynamic_rotate %77 by %c8_i32 dim 1 : vector<2x128xf32>, i32 -> vector<2x128xf32>
        %79 = arith.addf %77, %78 : vector<2x128xf32>
        %c16_i32 = arith.constant 16 : i32
        %80 = tpu.dynamic_rotate %79 by %c16_i32 dim 1 : vector<2x128xf32>, i32 -> vector<2x128xf32>
        %81 = arith.addf %79, %80 : vector<2x128xf32>
        %c32_i32 = arith.constant 32 : i32
        %82 = tpu.dynamic_rotate %81 by %c32_i32 dim 1 : vector<2x128xf32>, i32 -> vector<2x128xf32>
        %83 = arith.addf %81, %82 : vector<2x128xf32>
        %c64_i32 = arith.constant 64 : i32
        %84 = tpu.dynamic_rotate %83 by %c64_i32 dim 1 : vector<2x128xf32>, i32 -> vector<2x128xf32>
        %85 = arith.addf %83, %84 : vector<2x128xf32>
        %86 = vector.extract_strided_slice %85 {offsets = [0, 0], sizes = [1, 128], strides = [1, 1]} : vector<2x128xf32> to vector<1x128xf32>
        %cst_72 = arith.constant 5.120000e+02 : f32
        %87 = vector.broadcast %cst_72 : f32 to vector<1x128xf32>
        %88 = arith.divf %86, %87 : vector<1x128xf32>
        %89 = vector.extract_strided_slice %85 {offsets = [1, 0], sizes = [1, 128], strides = [1, 1]} : vector<2x128xf32> to vector<1x128xf32>
        %cst_73 = arith.constant 5.120000e+02 : f32
        %90 = vector.broadcast %cst_73 : f32 to vector<1x128xf32>
        %91 = arith.divf %89, %90 : vector<1x128xf32>
        %92 = arith.mulf %88, %88 : vector<1x128xf32>
        %93 = arith.subf %91, %92 : vector<1x128xf32>
        %c0_74 = arith.constant 0 : index
        %c0_75 = arith.constant 0 : index
        %94 = vector.load %arg7[%c0_74, %c0_75] : memref<1x128xf32, #tpu.memory_space<vmem>>, vector<1x128xf32>
        %cst_76 = arith.constant 9.99999974E-6 : f32
        %95 = vector.broadcast %cst_76 : f32 to vector<1x128xf32>
        %96 = arith.addf %93, %95 : vector<1x128xf32>
        %97 = math.rsqrt %96 : vector<1x128xf32>
        %98 = arith.mulf %94, %97 : vector<1x128xf32>
        %c0_77 = arith.constant 0 : index
        %c0_78 = arith.constant 0 : index
        %99 = vector.load %arg10[%c0_77, %c0_78] : memref<2x128xf32, #tpu.memory_space<vmem>>, vector<1x128xf32>
        tpu.vector_store %arg10[%c0_77, %c0_78], %98 {strides = array<i32>} : memref<2x128xf32, #tpu.memory_space<vmem>>, vector<1x128xf32>,
        %c0_79 = arith.constant 0 : index
        %c0_80 = arith.constant 0 : index
        %100 = vector.load %arg8[%c0_79, %c0_80] : memref<1x128xf32, #tpu.memory_space<vmem>>, vector<1x128xf32>
        %101 = arith.mulf %88, %98 : vector<1x128xf32>
        %102 = arith.subf %100, %101 : vector<1x128xf32>
        %c1_81 = arith.constant 1 : index
        %c0_82 = arith.constant 0 : index
        %103 = vector.load %arg10[%c1_81, %c0_82] : memref<2x128xf32, #tpu.memory_space<vmem>>, vector<1x128xf32>
        tpu.vector_store %arg10[%c1_81, %c0_82], %102 {strides = array<i32>} : memref<2x128xf32, #tpu.memory_space<vmem>>, vector<1x128xf32>,
      } else {
      }
    } else {
    }
    return
  }
  func.func @transform_0(%arg0: i32, %arg1: i32) -> (i32, i32, i32) {
    %c0_i32 = arith.constant 0 : i32
    %c0_i32_0 = arith.constant 0 : i32
    %c0_i32_1 = arith.constant 0 : i32
    return %arg1, %c0_i32, %c0_i32_0 : i32, i32, i32
  }
  func.func @transform_1(%arg0: i32, %arg1: i32) -> (i32, i32) {
    %c0_i32 = arith.constant 0 : i32
    %c0_i32_0 = arith.constant 0 : i32
    %c0_i32_1 = arith.constant 0 : i32
    return %c0_i32, %c0_i32_0 : i32, i32
  }
  func.func @transform_2(%arg0: i32, %arg1: i32) -> (i32, i32) {
    %c0_i32 = arith.constant 0 : i32
    %c0_i32_0 = arith.constant 0 : i32
    %c0_i32_1 = arith.constant 0 : i32
    return %c0_i32, %c0_i32_0 : i32, i32
  }
  func.func @transform_3(%arg0: i32, %arg1: i32) -> (i32, i32) {
    %c0_i32 = arith.constant 0 : i32
    %c0_i32_0 = arith.constant 0 : i32
    %c0_i32_1 = arith.constant 0 : i32
    return %c0_i32, %c0_i32_0 : i32, i32
  }
  func.func @transform_4(%arg0: i32, %arg1: i32) -> (i32, i32) {
    %c0_i32 = arith.constant 0 : i32
    %c0_i32_0 = arith.constant 0 : i32
    %c0_i32_1 = arith.constant 0 : i32
    return %c0_i32, %c0_i32_0 : i32, i32
  }
  func.func @transform_5(%arg0: i32, %arg1: i32) -> (i32, i32) {
    %c0_i32 = arith.constant 0 : i32
    %c0_i32_0 = arith.constant 0 : i32
    %c0_i32_1 = arith.constant 0 : i32
    return %c0_i32, %c0_i32_0 : i32, i32
  }
  func.func @transform_6(%arg0: i32, %arg1: i32) -> (i32, i32) {
    %c0_i32 = arith.constant 0 : i32
    %c0_i32_0 = arith.constant 0 : i32
    %c0_i32_1 = arith.constant 0 : i32
    return %c0_i32, %c0_i32_0 : i32, i32
  }
  func.func @transform_7(%arg0: i32, %arg1: i32) -> (i32, i32) {
    %c0_i32 = arith.constant 0 : i32
    %c0_i32_0 = arith.constant 0 : i32
    %c0_i32_1 = arith.constant 0 : i32
    return %c0_i32, %c0_i32_0 : i32, i32
  }
  func.func @transform_8(%arg0: i32, %arg1: i32) -> (i32, i32) {
    %c0_i32 = arith.constant 0 : i32
    %c0_i32_0 = arith.constant 0 : i32
    %c0_i32_1 = arith.constant 0 : i32
    return %c0_i32, %c0_i32_0 : i32, i32
  }
}

module attributes {stable_mosaic.version = 11 : i64} {
  func.func @out_kernel(%arg0: i32, %arg1: memref<2x10x128xbf16, #tpu.memory_space<vmem>>, %arg2: memref<16x128xf32, #tpu.memory_space<vmem>>, %arg3: memref<384x128xbf16, #tpu.memory_space<vmem>>, %arg4: memref<384x128xbf16, #tpu.memory_space<vmem>>, %arg5: memref<2x128xf32, #tpu.memory_space<vmem>>, %arg6: memref<2x128xf32, #tpu.memory_space<vmem>>, %arg7: memref<16x128xf32, #tpu.memory_space<vmem>>, %arg8: memref<2x10x128xbf16, #tpu.memory_space<vmem>>) attributes {dimension_semantics = [#tpu.dimension_semantics<parallel>], iteration_bounds = array<i64: 1>, scalar_prefetch = 0 : i64, scratch_operands = 1 : i64, tpu.core_type = #tpu.core_type<tc>, window_params = [{transform_indices = @transform_0, window_bounds = array<i64: 2, 10, 128>}, {transform_indices = @transform_1, window_bounds = array<i64: 16, 128>}, {pipeline_mode = #tpu.pipeline_mode<synchronous>, transform_indices = @transform_2, window_bounds = array<i64: 384, 128>}, {pipeline_mode = #tpu.pipeline_mode<synchronous>, transform_indices = @transform_3, window_bounds = array<i64: 384, 128>}, {pipeline_mode = #tpu.pipeline_mode<synchronous>, transform_indices = @transform_4, window_bounds = array<i64: 2, 128>}, {pipeline_mode = #tpu.pipeline_mode<synchronous>, transform_indices = @transform_5, window_bounds = array<i64: 2, 128>}, {transform_indices = @transform_6, window_bounds = array<i64: 16, 128>}]} {
    %c0 = arith.constant 0 : index
    %c0_0 = arith.constant 0 : index
    %c0_1 = arith.constant 0 : index
    %0 = vector.load %arg1[%c0, %c0_0, %c0_1] : memref<2x10x128xbf16, #tpu.memory_space<vmem>>, vector<1x8x128xbf16>
    %1 = vector.shape_cast %0 : vector<1x8x128xbf16> to vector<8x128xbf16>
    %c0_2 = arith.constant 0 : index
    %c1 = arith.constant 1 : index
    %c0_3 = arith.constant 0 : index
    %2 = vector.load %arg1[%c0_2, %c1, %c0_3] : memref<2x10x128xbf16, #tpu.memory_space<vmem>>, vector<1x8x128xbf16>
    %3 = vector.shape_cast %2 : vector<1x8x128xbf16> to vector<8x128xbf16>
    %c0_4 = arith.constant 0 : index
    %c2 = arith.constant 2 : index
    %c0_5 = arith.constant 0 : index
    %4 = vector.load %arg1[%c0_4, %c2, %c0_5] : memref<2x10x128xbf16, #tpu.memory_space<vmem>>, vector<1x8x128xbf16>
    %5 = vector.shape_cast %4 : vector<1x8x128xbf16> to vector<8x128xbf16>
    %6 = tpu.concatenate %1, %3, %5 in 1 : vector<8x128xbf16>, vector<8x128xbf16>, vector<8x128xbf16> -> vector<8x384xbf16>
    %c1_6 = arith.constant 1 : index
    %c0_7 = arith.constant 0 : index
    %c0_8 = arith.constant 0 : index
    %7 = vector.load %arg1[%c1_6, %c0_7, %c0_8] : memref<2x10x128xbf16, #tpu.memory_space<vmem>>, vector<1x8x128xbf16>
    %8 = vector.shape_cast %7 : vector<1x8x128xbf16> to vector<8x128xbf16>
    %c1_9 = arith.constant 1 : index
    %c1_10 = arith.constant 1 : index
    %c0_11 = arith.constant 0 : index
    %9 = vector.load %arg1[%c1_9, %c1_10, %c0_11] : memref<2x10x128xbf16, #tpu.memory_space<vmem>>, vector<1x8x128xbf16>
    %10 = vector.shape_cast %9 : vector<1x8x128xbf16> to vector<8x128xbf16>
    %c1_12 = arith.constant 1 : index
    %c2_13 = arith.constant 2 : index
    %c0_14 = arith.constant 0 : index
    %11 = vector.load %arg1[%c1_12, %c2_13, %c0_14] : memref<2x10x128xbf16, #tpu.memory_space<vmem>>, vector<1x8x128xbf16>
    %12 = vector.shape_cast %11 : vector<1x8x128xbf16> to vector<8x128xbf16>
    %13 = tpu.concatenate %8, %10, %12 in 1 : vector<8x128xbf16>, vector<8x128xbf16>, vector<8x128xbf16> -> vector<8x384xbf16>
    %14 = tpu.concatenate %6, %13 in 0 : vector<8x384xbf16>, vector<8x384xbf16> -> vector<16x384xbf16>
    %c0_15 = arith.constant 0 : index
    %c0_16 = arith.constant 0 : index
    %15 = vector.load %arg3[%c0_15, %c0_16] : memref<384x128xbf16, #tpu.memory_space<vmem>>, vector<384x128xbf16>
    %cst = arith.constant dense<0.000000e+00> : vector<16x128xf32>
    %16 = tpu.matmul %14, %15, %cst {dimension_numbers = #tpu.dot_dimension_numbers<[1], [0], [0], [1], [0, 0, 1, 1], [], []>} : vector<16x384xbf16>, vector<384x128xbf16>, vector<16x128xf32> -> vector<16x128xf32>
    %c0_17 = arith.constant 0 : index
    %c0_18 = arith.constant 0 : index
    %17 = vector.load %arg5[%c0_17, %c0_18] : memref<2x128xf32, #tpu.memory_space<vmem>>, vector<1x128xf32>
    %18 = vector.broadcast %17 : vector<1x128xf32> to vector<16x128xf32>
    %19 = arith.mulf %16, %18 : vector<16x128xf32>
    %c1_19 = arith.constant 1 : index
    %c0_20 = arith.constant 0 : index
    %20 = vector.load %arg5[%c1_19, %c0_20] : memref<2x128xf32, #tpu.memory_space<vmem>>, vector<1x128xf32>
    %21 = vector.broadcast %20 : vector<1x128xf32> to vector<16x128xf32>
    %22 = arith.addf %19, %21 : vector<16x128xf32>
    %cst_21 = arith.constant 0.000000e+00 : f32
    %23 = vector.broadcast %cst_21 : f32 to vector<16x128xf32>
    %24 = arith.cmpf oge, %22, %23 : vector<16x128xf32>
    %cst_22 = arith.constant 2.000000e-01 : f32
    %25 = vector.broadcast %cst_22 : f32 to vector<16x128xf32>
    %26 = arith.mulf %25, %22 : vector<16x128xf32>
    %27 = arith.select %24, %22, %26 : vector<16x128xi1>, vector<16x128xf32>
    %cst_23 = arith.constant 0.000000e+00 : bf16
    %28 = vector.broadcast %cst_23 : bf16 to vector<2x1x128xbf16>
    %c0_24 = arith.constant 0 : index
    %c0_25 = arith.constant 0 : index
    %c0_26 = arith.constant 0 : index
    %29 = vector.load %arg8[%c0_24, %c0_25, %c0_26] : memref<2x10x128xbf16, #tpu.memory_space<vmem>>, vector<2x1x128xbf16>
    tpu.vector_store %arg8[%c0_24, %c0_25, %c0_26], %28 {strides = array<i32>} : memref<2x10x128xbf16, #tpu.memory_space<vmem>>, vector<2x1x128xbf16>,
    %cst_27 = arith.constant 0.000000e+00 : bf16
    %30 = vector.broadcast %cst_27 : bf16 to vector<2x1x128xbf16>
    %c0_28 = arith.constant 0 : index
    %c9 = arith.constant 9 : index
    %c0_29 = arith.constant 0 : index
    %31 = vector.load %arg8[%c0_28, %c9, %c0_29] : memref<2x10x128xbf16, #tpu.memory_space<vmem>>, vector<2x1x128xbf16>
    tpu.vector_store %arg8[%c0_28, %c9, %c0_29], %30 {strides = array<i32>} : memref<2x10x128xbf16, #tpu.memory_space<vmem>>, vector<2x1x128xbf16>,
    %32 = arith.truncf %27 : vector<16x128xf32> to vector<16x128xbf16>
    %33 = vector.shape_cast %32 : vector<16x128xbf16> to vector<2x8x128xbf16>
    %c0_30 = arith.constant 0 : index
    %c1_31 = arith.constant 1 : index
    %c0_32 = arith.constant 0 : index
    %34 = vector.load %arg8[%c0_30, %c1_31, %c0_32] : memref<2x10x128xbf16, #tpu.memory_space<vmem>>, vector<2x8x128xbf16>
    tpu.vector_store %arg8[%c0_30, %c1_31, %c0_32], %33 {strides = array<i32>} : memref<2x10x128xbf16, #tpu.memory_space<vmem>>, vector<2x8x128xbf16>,
    %c0_33 = arith.constant 0 : index
    %c0_34 = arith.constant 0 : index
    %c0_35 = arith.constant 0 : index
    %35 = vector.load %arg8[%c0_33, %c0_34, %c0_35] : memref<2x10x128xbf16, #tpu.memory_space<vmem>>, vector<1x8x128xbf16>
    %36 = vector.shape_cast %35 : vector<1x8x128xbf16> to vector<8x128xbf16>
    %c0_36 = arith.constant 0 : index
    %c1_37 = arith.constant 1 : index
    %c0_38 = arith.constant 0 : index
    %37 = vector.load %arg8[%c0_36, %c1_37, %c0_38] : memref<2x10x128xbf16, #tpu.memory_space<vmem>>, vector<1x8x128xbf16>
    %38 = vector.shape_cast %37 : vector<1x8x128xbf16> to vector<8x128xbf16>
    %c0_39 = arith.constant 0 : index
    %c2_40 = arith.constant 2 : index
    %c0_41 = arith.constant 0 : index
    %39 = vector.load %arg8[%c0_39, %c2_40, %c0_41] : memref<2x10x128xbf16, #tpu.memory_space<vmem>>, vector<1x8x128xbf16>
    %40 = vector.shape_cast %39 : vector<1x8x128xbf16> to vector<8x128xbf16>
    %41 = tpu.concatenate %36, %38, %40 in 1 : vector<8x128xbf16>, vector<8x128xbf16>, vector<8x128xbf16> -> vector<8x384xbf16>
    %c1_42 = arith.constant 1 : index
    %c0_43 = arith.constant 0 : index
    %c0_44 = arith.constant 0 : index
    %42 = vector.load %arg8[%c1_42, %c0_43, %c0_44] : memref<2x10x128xbf16, #tpu.memory_space<vmem>>, vector<1x8x128xbf16>
    %43 = vector.shape_cast %42 : vector<1x8x128xbf16> to vector<8x128xbf16>
    %c1_45 = arith.constant 1 : index
    %c1_46 = arith.constant 1 : index
    %c0_47 = arith.constant 0 : index
    %44 = vector.load %arg8[%c1_45, %c1_46, %c0_47] : memref<2x10x128xbf16, #tpu.memory_space<vmem>>, vector<1x8x128xbf16>
    %45 = vector.shape_cast %44 : vector<1x8x128xbf16> to vector<8x128xbf16>
    %c1_48 = arith.constant 1 : index
    %c2_49 = arith.constant 2 : index
    %c0_50 = arith.constant 0 : index
    %46 = vector.load %arg8[%c1_48, %c2_49, %c0_50] : memref<2x10x128xbf16, #tpu.memory_space<vmem>>, vector<1x8x128xbf16>
    %47 = vector.shape_cast %46 : vector<1x8x128xbf16> to vector<8x128xbf16>
    %48 = tpu.concatenate %43, %45, %47 in 1 : vector<8x128xbf16>, vector<8x128xbf16>, vector<8x128xbf16> -> vector<8x384xbf16>
    %49 = tpu.concatenate %41, %48 in 0 : vector<8x384xbf16>, vector<8x384xbf16> -> vector<16x384xbf16>
    %c0_51 = arith.constant 0 : index
    %c0_52 = arith.constant 0 : index
    %50 = vector.load %arg4[%c0_51, %c0_52] : memref<384x128xbf16, #tpu.memory_space<vmem>>, vector<384x128xbf16>
    %cst_53 = arith.constant dense<0.000000e+00> : vector<16x128xf32>
    %51 = tpu.matmul %49, %50, %cst_53 {dimension_numbers = #tpu.dot_dimension_numbers<[1], [0], [0], [1], [0, 0, 1, 1], [], []>} : vector<16x384xbf16>, vector<384x128xbf16>, vector<16x128xf32> -> vector<16x128xf32>
    %c0_54 = arith.constant 0 : index
    %c0_55 = arith.constant 0 : index
    %52 = vector.load %arg6[%c0_54, %c0_55] : memref<2x128xf32, #tpu.memory_space<vmem>>, vector<1x128xf32>
    %53 = vector.broadcast %52 : vector<1x128xf32> to vector<16x128xf32>
    %54 = arith.mulf %51, %53 : vector<16x128xf32>
    %c1_56 = arith.constant 1 : index
    %c0_57 = arith.constant 0 : index
    %55 = vector.load %arg6[%c1_56, %c0_57] : memref<2x128xf32, #tpu.memory_space<vmem>>, vector<1x128xf32>
    %56 = vector.broadcast %55 : vector<1x128xf32> to vector<16x128xf32>
    %57 = arith.addf %54, %56 : vector<16x128xf32>
    %c0_58 = arith.constant 0 : index
    %c0_59 = arith.constant 0 : index
    %58 = vector.load %arg2[%c0_58, %c0_59] : memref<16x128xf32, #tpu.memory_space<vmem>>, vector<16x128xf32>
    %59 = arith.addf %57, %58 : vector<16x128xf32>
    %cst_60 = arith.constant 0.000000e+00 : f32
    %60 = vector.broadcast %cst_60 : f32 to vector<16x128xf32>
    %61 = arith.cmpf oge, %59, %60 : vector<16x128xf32>
    %cst_61 = arith.constant 2.000000e-01 : f32
    %62 = vector.broadcast %cst_61 : f32 to vector<16x128xf32>
    %63 = arith.mulf %62, %59 : vector<16x128xf32>
    %64 = arith.select %61, %59, %63 : vector<16x128xi1>, vector<16x128xf32>
    %c0_62 = arith.constant 0 : index
    %c0_63 = arith.constant 0 : index
    %65 = vector.load %arg7[%c0_62, %c0_63] : memref<16x128xf32, #tpu.memory_space<vmem>>, vector<16x128xf32>
    tpu.vector_store %arg7[%c0_62, %c0_63], %64 {strides = array<i32>} : memref<16x128xf32, #tpu.memory_space<vmem>>, vector<16x128xf32>,
    return
  }
  func.func @transform_0(%arg0: i32) -> (i32, i32, i32) {
    %c0_i32 = arith.constant 0 : i32
    %c0_i32_0 = arith.constant 0 : i32
    %c0_i32_1 = arith.constant 0 : i32
    return %arg0, %c0_i32, %c0_i32_0 : i32, i32, i32
  }
  func.func @transform_1(%arg0: i32) -> (i32, i32) {
    %c0_i32 = arith.constant 0 : i32
    %c0_i32_0 = arith.constant 0 : i32
    return %arg0, %c0_i32 : i32, i32
  }
  func.func @transform_2(%arg0: i32) -> (i32, i32) {
    %c0_i32 = arith.constant 0 : i32
    %c0_i32_0 = arith.constant 0 : i32
    %c0_i32_1 = arith.constant 0 : i32
    return %c0_i32, %c0_i32_0 : i32, i32
  }
  func.func @transform_3(%arg0: i32) -> (i32, i32) {
    %c0_i32 = arith.constant 0 : i32
    %c0_i32_0 = arith.constant 0 : i32
    %c0_i32_1 = arith.constant 0 : i32
    return %c0_i32, %c0_i32_0 : i32, i32
  }
  func.func @transform_4(%arg0: i32) -> (i32, i32) {
    %c0_i32 = arith.constant 0 : i32
    %c0_i32_0 = arith.constant 0 : i32
    %c0_i32_1 = arith.constant 0 : i32
    return %c0_i32, %c0_i32_0 : i32, i32
  }
  func.func @transform_5(%arg0: i32) -> (i32, i32) {
    %c0_i32 = arith.constant 0 : i32
    %c0_i32_0 = arith.constant 0 : i32
    %c0_i32_1 = arith.constant 0 : i32
    return %c0_i32, %c0_i32_0 : i32, i32
  }
  func.func @transform_6(%arg0: i32) -> (i32, i32) {
    %c0_i32 = arith.constant 0 : i32
    %c0_i32_0 = arith.constant 0 : i32
    return %arg0, %c0_i32 : i32, i32
  }
}

</mosaic_0001>

<llo_original>
// kernel: residual_block_encoder.2
$region0: #{residual_block_encoder.2}
  #allocation0 [shape = 'u32[]', space=smem, size = 0x4, offset = 0x4, fixed_abs, tag = 'smem constant byte address 0x4 - core index']
  #allocation1 [shape = 'u32[144,128]{1,0:T(1,128)}', space=vmem, size = 0x12000, scoped, tag = 'internal scratch']
  #allocation2 [shape = 'f32[2,128]{1,0:T(2,128)}', space=vmem, size = 0x400, scoped, tag = 'scratch operand']
  #allocation3 [shape = 'f32[2,128]{1,0:T(2,128)}', space=vmem, size = 0x400, scoped, tag = 'scratch operand']
  #allocation4 [shape = 'bf16[2,10,128]{2,1,0:T(8,128)(2,1)}', space=vmem, size = 0x2000, scoped, tag = 'scratch operand']
  %s0 = inlined_call_operand.vmem [shape: bf16[2,10,128], index: 0, kind: input, shape index: {}]
  %s1 = inlined_call_operand.vmem [shape: bf16[384,128], index: 1, kind: input, shape index: {}]
  %s2 = inlined_call_operand.vmem [shape: bf16[384,128], index: 2, kind: input, shape index: {}]
  %s3 = inlined_call_operand.vmem [shape: f32[1,128], index: 3, kind: input, shape index: {}]
  %s4 = inlined_call_operand.vmem [shape: f32[1,128], index: 4, kind: input, shape index: {}]
  %s5 = inlined_call_operand.vmem [shape: f32[1,128], index: 5, kind: input, shape index: {}]
  %s6 = inlined_call_operand.vmem [shape: f32[1,128], index: 6, kind: input, shape index: {}]
  %s7 = inlined_call_operand.vmem [shape: f32[2,128], index: 7, kind: output, shape index: {0}]
  %s8 = inlined_call_operand.vmem [shape: f32[2,128], index: 8, kind: output, shape index: {1}]
  %9 = xla_tuple %s7, %s8
  %s10 = sld [smem:[#allocation0]]
  $region93: #{residual_block_encoder.2} parent=0
    _
  %s12 = ssub.s32 1, %s10
  %s13 = scalar_select 0, %s12, %s10
  loop: start=0, step=1, limit=4
  $region2: #{residual_block_encoder.2} parent=0 // loop_pre_header
    _
  $region3: #{residual_block_encoder.2} parent=0 // loop_header
    %s15 = sphi 0, %s19
    %p16 = scmp.ge.s32.totalorder %s15, 4
    %s22 = sphi 0, %s34
    %s23 = sphi 0, %s30
    %s24 = sphi 0, %s22
    %s25 = sphi 0, %s23
    %s26 = sphi 0, %s24
    %s27 = sphi 0, %s25
    %s37 = sphi 0, %s39
    %s40 = sphi 0, %s37
    %s41 = sphi 0, %s40
    %s57 = sphi 0, %s41
    %s61 = sphi 0, %s61
    %s63 = sphi 0, %s61
    %s64 = sphi 0, %s63
    %s78 = sphi 0, %s64
    %s82 = sphi 0, %s82
    %s84 = sphi 0, %s82
    %s85 = sphi 0, %s84
    %s99 = sphi 0, %s85
    %s103 = sphi 0, %s103
    %s105 = sphi 0, %s103
    %s106 = sphi 0, %s105
    %s120 = sphi 0, %s106
    %s124 = sphi 0, %s124
    %s126 = sphi 0, %s124
    %s127 = sphi 0, %s126
    %s141 = sphi 0, %s127
    %s145 = sphi 0, %s145
    %s147 = sphi 0, %s145
    %s148 = sphi 0, %s147
    %s162 = sphi 0, %s148
    %s166 = sphi 0, %s166
    %s168 = sphi 0, %s166
    %s169 = sphi 0, %s168
    %s183 = sphi 0, %s169
    %s187 = sphi 0, %s187
    %s189 = sphi 0, %s187
    %s190 = sphi 0, %s189
    %s204 = sphi 0, %s190
    %s208 = sphi 0, %s208
    %s210 = sphi 0, %s208
    %s211 = sphi 0, %s210
    %s225 = sphi 0, %s211
  $region4: #{residual_block_encoder.2} parent=0 // loop_header_branch
    %18 = sbr.rel (%p16) target = $region8
  $region5: #{residual_block_encoder.2} parent=0 // loop_body
    %s20 = ssub.s32 %s15, 1
    %s21 = ssub.s32 %s15, 2
    %s28 = sadd.s32 1, %s23
    %p29 = scmp.ge.s32.totalorder %s28, 1
    %s30 = scalar_select %p29, 0, %s28
    %s31 = sadd.s32 1, %s22
    %s32 = scalar_select %p29, %s31, %s22
    %p33 = scmp.ge.s32.totalorder %s32, 2
    %s34 = scalar_select %p33, 0, %s32
    %s35 = ssub.s32 %s23, %s30
    %p36 = scmp.eq.s32.totalorder %s35, 0
    %s38 = sadd.s32 %s37, 1
    %s39 = scalar_select %p36, %s37, %s38
    %p42 = pneg %p36
    %p43 = scmp.eq.s32.totalorder %s15, 1
    %p44 = por %p42, %p43
    %p45 = scmp.ne.s32.totalorder %s37, %s40
    %p46 = scmp.eq.s32.totalorder %s15, 0
    %p47 = por %p45, %p46
    %p48 = scmp.ne.s32.totalorder %s37, %s40
    %p49 = scmp.eq.s32.totalorder %s20, 1
    %p50 = por %p48, %p49
    %p51 = scmp.ne.s32.totalorder %s40, %s41
    %p52 = scmp.eq.s32.totalorder %s20, 0
    %p53 = por %p51, %p52
    %p54 = scmp.ne.s32.totalorder %s40, %s41
    %p55 = scmp.eq.s32.totalorder %s21, 1
    %p56 = por %p54, %p55
    %p58 = scmp.ne.s32.totalorder %s41, %s57
    %p59 = scmp.eq.s32.totalorder %s21, 0
    %p60 = por %p58, %p59
    %s62 = sadd.s32 %s61, 1
    %p65 = scmp.eq.s32.totalorder %s15, 1
    %p66 = scmp.ne.s32.totalorder %s61, %s63
    %p67 = scmp.eq.s32.totalorder %s15, 0
    %p68 = por %p66, %p67
    %p69 = scmp.ne.s32.totalorder %s61, %s63
    %p70 = scmp.eq.s32.totalorder %s20, 1
    %p71 = por %p69, %p70
    %p72 = scmp.ne.s32.totalorder %s63, %s64
    %p73 = scmp.eq.s32.totalorder %s20, 0
    %p74 = por %p72, %p73
    %p75 = scmp.ne.s32.totalorder %s63, %s64
    %p76 = scmp.eq.s32.totalorder %s21, 1
    %p77 = por %p75, %p76
    %p79 = scmp.ne.s32.totalorder %s64, %s78
    %p80 = scmp.eq.s32.totalorder %s21, 0
    %p81 = por %p79, %p80
    %s83 = sadd.s32 %s82, 1
    %p86 = scmp.eq.s32.totalorder %s15, 1
    %p87 = scmp.ne.s32.totalorder %s82, %s84
    %p88 = scmp.eq.s32.totalorder %s15, 0
    %p89 = por %p87, %p88
    %p90 = scmp.ne.s32.totalorder %s82, %s84
    %p91 = scmp.eq.s32.totalorder %s20, 1
    %p92 = por %p90, %p91
    %p93 = scmp.ne.s32.totalorder %s84, %s85
    %p94 = scmp.eq.s32.totalorder %s20, 0
    %p95 = por %p93, %p94
    %p96 = scmp.ne.s32.totalorder %s84, %s85
    %p97 = scmp.eq.s32.totalorder %s21, 1
    %p98 = por %p96, %p97
    %p100 = scmp.ne.s32.totalorder %s85, %s99
    %p101 = scmp.eq.s32.totalorder %s21, 0
    %p102 = por %p100, %p101
    %s104 = sadd.s32 %s103, 1
    %p107 = scmp.eq.s32.totalorder %s15, 1
    %p108 = scmp.ne.s32.totalorder %s103, %s105
    %p109 = scmp.eq.s32.totalorder %s15, 0
    %p110 = por %p108, %p109
    %p111 = scmp.ne.s32.totalorder %s103, %s105
    %p112 = scmp.eq.s32.totalorder %s20, 1
    %p113 = por %p111, %p112
    %p114 = scmp.ne.s32.totalorder %s105, %s106
    %p115 = scmp.eq.s32.totalorder %s20, 0
    %p116 = por %p114, %p115
    %p117 = scmp.ne.s32.totalorder %s105, %s106
    %p118 = scmp.eq.s32.totalorder %s21, 1
    %p119 = por %p117, %p118
    %p121 = scmp.ne.s32.totalorder %s106, %s120
    %p122 = scmp.eq.s32.totalorder %s21, 0
    %p123 = por %p121, %p122
    %s125 = sadd.s32 %s124, 1
    %p128 = scmp.eq.s32.totalorder %s15, 1
    %p129 = scmp.ne.s32.totalorder %s124, %s126
    %p130 = scmp.eq.s32.totalorder %s15, 0
    %p131 = por %p129, %p130
    %p132 = scmp.ne.s32.totalorder %s124, %s126
    %p133 = scmp.eq.s32.totalorder %s20, 1
    %p134 = por %p132, %p133
    %p135 = scmp.ne.s32.totalorder %s126, %s127
    %p136 = scmp.eq.s32.totalorder %s20, 0
    %p137 = por %p135, %p136
    %p138 = scmp.ne.s32.totalorder %s126, %s127
    %p139 = scmp.eq.s32.totalorder %s21, 1
    %p140 = por %p138, %p139
    %p142 = scmp.ne.s32.totalorder %s127, %s141
    %p143 = scmp.eq.s32.totalorder %s21, 0
    %p144 = por %p142, %p143
    %s146 = sadd.s32 %s145, 1
    %p149 = scmp.eq.s32.totalorder %s15, 1
    %p150 = scmp.ne.s32.totalorder %s145, %s147
    %p151 = scmp.eq.s32.totalorder %s15, 0
    %p152 = por %p150, %p151
    %p153 = scmp.ne.s32.totalorder %s145, %s147
    %p154 = scmp.eq.s32.totalorder %s20, 1
    %p155 = por %p153, %p154
    %p156 = scmp.ne.s32.totalorder %s147, %s148
    %p157 = scmp.eq.s32.totalorder %s20, 0
    %p158 = por %p156, %p157
    %p159 = scmp.ne.s32.totalorder %s147, %s148
    %p160 = scmp.eq.s32.totalorder %s21, 1
    %p161 = por %p159, %p160
    %p163 = scmp.ne.s32.totalorder %s148, %s162
    %p164 = scmp.eq.s32.totalorder %s21, 0
    %p165 = por %p163, %p164
    %s167 = sadd.s32 %s166, 1
    %p170 = scmp.eq.s32.totalorder %s15, 1
    %p171 = scmp.ne.s32.totalorder %s166, %s168
    %p172 = scmp.eq.s32.totalorder %s15, 0
    %p173 = por %p171, %p172
    %p174 = scmp.ne.s32.totalorder %s166, %s168
    %p175 = scmp.eq.s32.totalorder %s20, 1
    %p176 = por %p174, %p175
    %p177 = scmp.ne.s32.totalorder %s168, %s169
    %p178 = scmp.eq.s32.totalorder %s20, 0
    %p179 = por %p177, %p178
    %p180 = scmp.ne.s32.totalorder %s168, %s169
    %p181 = scmp.eq.s32.totalorder %s21, 1
    %p182 = por %p180, %p181
    %p184 = scmp.ne.s32.totalorder %s169, %s183
    %p185 = scmp.eq.s32.totalorder %s21, 0
    %p186 = por %p184, %p185
    %s188 = sadd.s32 %s187, 1
    %p191 = scmp.eq.s32.totalorder %s15, 1
    %p192 = scmp.ne.s32.totalorder %s187, %s189
    %p193 = scmp.eq.s32.totalorder %s15, 0
    %p194 = por %p192, %p193
    %p195 = scmp.ne.s32.totalorder %s187, %s189
    %p196 = scmp.eq.s32.totalorder %s20, 1
    %p197 = por %p195, %p196
    %p198 = scmp.ne.s32.totalorder %s189, %s190
    %p199 = scmp.eq.s32.totalorder %s20, 0
    %p200 = por %p198, %p199
    %p201 = scmp.ne.s32.totalorder %s189, %s190
    %p202 = scmp.eq.s32.totalorder %s21, 1
    %p203 = por %p201, %p202
    %p205 = scmp.ne.s32.totalorder %s190, %s204
    %p206 = scmp.eq.s32.totalorder %s21, 0
    %p207 = por %p205, %p206
    %s209 = sadd.s32 %s208, 1
    %p212 = scmp.eq.s32.totalorder %s15, 1
    %p213 = scmp.ne.s32.totalorder %s208, %s210
    %p214 = scmp.eq.s32.totalorder %s15, 0
    %p215 = por %p213, %p214
    %p216 = scmp.ne.s32.totalorder %s208, %s210
    %p217 = scmp.eq.s32.totalorder %s20, 1
    %p218 = por %p216, %p217
    %p219 = scmp.ne.s32.totalorder %s210, %s211
    %p220 = scmp.eq.s32.totalorder %s20, 0
    %p221 = por %p219, %p220
    %p222 = scmp.ne.s32.totalorder %s210, %s211
    %p223 = scmp.eq.s32.totalorder %s21, 1
    %p224 = por %p222, %p223
    %p226 = scmp.ne.s32.totalorder %s211, %s225
    %p227 = scmp.eq.s32.totalorder %s21, 0
    %p228 = por %p226, %p227
    %p229 = scmp.le.s32.totalorder 1, %s15
    %p230 = scmp.lt.s32.totalorder %s15, 3
    %p231 = pnand %p229, %p230
    %p232 = pneg %p231
    // Predicated region
    $region9: #{residual_block_encoder.2} parent=5 // pred_check
      _
    $region10: #{residual_block_encoder.2} parent=5 // pred_check_branch
      %234 = sbr.rel (%p231) target = $region12
    $region11: #{residual_block_encoder.2} parent=5 // pred_region
      %s235 = ssub.s32 %s15, 1
      // Predicated region
      $region13: #{residual_block_encoder.2} parent=11 // pred_check
        %p236 = pneg %p53
      $region14: #{residual_block_encoder.2} parent=11 // pred_check_branch
        %238 = sbr.rel (%p236) target = $region16
      $region15: #{residual_block_encoder.2} parent=11 // pred_region
        %s239 = smul.u32 2, %s25
        %p240 = scmp.lt.s32.totalorder %s239, 1
        %s241 = scalar_select %p240, %s239, 1
        %s242 = smul.addr %s241, 2
        %s243 = smul.addr %s242, 4
        %s244 = scalar_lea.vmem %s0, %s243
        %s245 = smul.u32 2, %s25
      $region16: #{residual_block_encoder.2} parent=11 // pred_fallthru
        _
      // Predicated region
      $region17: #{residual_block_encoder.2} parent=11 // pred_check
        %p246 = pneg %p74
      $region18: #{residual_block_encoder.2} parent=11 // pred_check_branch
        %248 = sbr.rel (%p246) target = $region20
      $region19: #{residual_block_encoder.2} parent=11 // pred_region
        _
      $region20: #{residual_block_encoder.2} parent=11 // pred_fallthru
        _
      // Predicated region
      $region21: #{residual_block_encoder.2} parent=11 // pred_check
        %p249 = pneg %p95
      $region22: #{residual_block_encoder.2} parent=11 // pred_check_branch
        %251 = sbr.rel (%p249) target = $region24
      $region23: #{residual_block_encoder.2} parent=11 // pred_region
        _
      $region24: #{residual_block_encoder.2} parent=11 // pred_fallthru
        _
      // Predicated region
      $region25: #{residual_block_encoder.2} parent=11 // pred_check
        %p252 = pneg %p116
      $region26: #{residual_block_encoder.2} parent=11 // pred_check_branch
        %254 = sbr.rel (%p252) target = $region28
      $region27: #{residual_block_encoder.2} parent=11 // pred_region
        _
      $region28: #{residual_block_encoder.2} parent=11 // pred_fallthru
        _
      // Predicated region
      $region29: #{residual_block_encoder.2} parent=11 // pred_check
        %p255 = pneg %p137
      $region30: #{residual_block_encoder.2} parent=11 // pred_check_branch
        %257 = sbr.rel (%p255) target = $region32
      $region31: #{residual_block_encoder.2} parent=11 // pred_region
        _
      $region32: #{residual_block_encoder.2} parent=11 // pred_fallthru
        _
      // Predicated region
      $region33: #{residual_block_encoder.2} parent=11 // pred_check
        %p258 = pneg %p158
      $region34: #{residual_block_encoder.2} parent=11 // pred_check_branch
        %260 = sbr.rel (%p258) target = $region36
      $region35: #{residual_block_encoder.2} parent=11 // pred_region
        _
      $region36: #{residual_block_encoder.2} parent=11 // pred_fallthru
        _
      // Predicated region
      $region37: #{residual_block_encoder.2} parent=11 // pred_check
        %p261 = pneg %p179
      $region38: #{residual_block_encoder.2} parent=11 // pred_check_branch
        %263 = sbr.rel (%p261) target = $region40
      $region39: #{residual_block_encoder.2} parent=11 // pred_region
        _
      $region40: #{residual_block_encoder.2} parent=11 // pred_fallthru
        _
    $region12: #{residual_block_encoder.2} parent=5 // pred_fallthru
      _
    %p264 = scmp.lt.s32.totalorder %s15, 2
    // Predicated region
    $region41: #{residual_block_encoder.2} parent=5 // pred_check
      %p265 = pneg %p264
    $region42: #{residual_block_encoder.2} parent=5 // pred_check_branch
      %267 = sbr.rel (%p265) target = $region44
    $region43: #{residual_block_encoder.2} parent=5 // pred_region
      _
    $region44: #{residual_block_encoder.2} parent=5 // pred_fallthru
      _
    %p268 = scmp.le.s32.totalorder 1, %s15
    %p269 = scmp.lt.s32.totalorder %s15, 3
    %p270 = pnand %p268, %p269
    %p271 = pneg %p270
    // Predicated region
    $region45: #{residual_block_encoder.2} parent=5 // pred_check
      _
    $region46: #{residual_block_encoder.2} parent=5 // pred_check_branch
      %273 = sbr.rel (%p270) target = $region48
    $region47: #{residual_block_encoder.2} parent=5 // pred_region
      %s274 = ssub.s32 %s15, 1
      %s275 = smul.u32 2, %s25
      %p276 = scmp.lt.s32.totalorder %s275, 1
      %s277 = scalar_select %p276, %s275, 1
      %s278 = smul.addr %s277, 2
      %s279 = smul.addr %s278, 4
      %s280 = scalar_lea.vmem %s0, %s279
      %p281 = pneg %p53
      %p282 = pneg %p50
      %p283 = pneg %p74
      %p284 = pneg %p71
      %p285 = pneg %p95
      %p286 = pneg %p92
      %p287 = pneg %p116
      %p288 = pneg %p113
      %p289 = pneg %p137
      %p290 = pneg %p134
      %p291 = pneg %p158
      %p292 = pneg %p155
      %p293 = pneg %p179
      %p294 = pneg %p176
      %p295 = pneg %p200
      %p296 = pneg %p197
      %p297 = pneg %p221
      %p298 = pneg %p218
      %s299 = smul.u32 2, %s25
      %p300 = scmp.lt.s32.totalorder %s299, 1
      %s301 = scalar_select %p300, %s299, 1
      %s302 = smul.addr %s301, 2
      %s303 = smul.addr %s302, 4
      %s304 = scalar_lea.vmem %s0, %s303
      %s305 = smul.u32 2, %s25
      %p307 = scmp.eq.s32.totalorder %s24, 0
      // Predicated region
      $region49: #{residual_block_encoder.2} parent=47 // pred_check
        %p308 = pneg %p307
      $region50: #{residual_block_encoder.2} parent=47 // pred_check_branch
        %310 = sbr.rel (%p308) target = $region52
      $region51: #{residual_block_encoder.2} parent=47 // pred_region
        %p311 = scmp.eq.s32.totalorder %s25, 0
        // Predicated region
        $region53: #{residual_block_encoder.2} parent=51 // pred_check
          %p312 = pneg %p311
        $region54: #{residual_block_encoder.2} parent=51 // pred_check_branch
          %314 = sbr.rel (%p312) target = $region56
        $region55: #{residual_block_encoder.2} parent=51 // pred_region
          %315 = vst [vmem:[#allocation2] sm:$0x3] 0.0
        $region56: #{residual_block_encoder.2} parent=51 // pred_fallthru
          _
        %v316 = vld [vmem:[%s304] sm:$0xf]
        %v317 = vld [vmem:[%s304 + $0x4] sm:$0x1]
        %v318 = vld [vmem:[%s304] sm:$0xe]
        %v321 = vunpack.c.l.b16 %v316
        %v322 = vunpack.c.l.b16 %v317
        %v323 = vpack.c.b16 %v322, %v321
        %v325 = vshrl.u32 %v323, 16
        %v327 = vshll.u32 %v323, 16
        %v329 = vrot.slane %v327, 1
        %v330 = vor.u32 %v325, %v329
        %v332 = vunpack.c.l.b16 %v318
        %v333 = vpack.c.b16 %v322, %v332
        %v334 = vrot.slane %v333, 1
        %s335 = scalar_lea.vmem %s304, 8
        %v336 = vld [vmem:[%s335] sm:$0xf]
        %v337 = vld [vmem:[%s335 + $0x4] sm:$0x1]
        %v338 = vld [vmem:[%s335] sm:$0xe]
        %v341 = vunpack.c.l.b16 %v336
        %v342 = vunpack.c.l.b16 %v337
        %v343 = vpack.c.b16 %v342, %v341
        %v345 = vshrl.u32 %v343, 16
        %v347 = vshll.u32 %v343, 16
        %v349 = vrot.slane %v347, 1
        %v350 = vor.u32 %v345, %v349
        %v352 = vunpack.c.l.b16 %v338
        %v353 = vpack.c.b16 %v342, %v352
        %v354 = vrot.slane %v353, 1
        %v355 = vrot.slane %v336, 4
        %v356 = vrot.slane %v350, 4
        %v357 = vrot.slane %v354, 4
        %vm358 = vcmask 1043456
        %v361 = vsel %vm358, %v316, %v355
        %v365 = vsel %vm358, %v330, %v356
        %v369 = vsel %vm358, %v334, %v357
        %v371 = vld [vmem:[%s1] sm:$0xf]
        %v372 = vld [vmem:[%s1 + $0x4] sm:$0xf]
        %v373 = vld [vmem:[%s1 + $0x8] sm:$0xf]
        %v374 = vld [vmem:[%s1 + $0xc] sm:$0xf]
        %v375 = vld [vmem:[%s1 + $0x10] sm:$0xf]
        %v376 = vld [vmem:[%s1 + $0x14] sm:$0xf]
        %v377 = vld [vmem:[%s1 + $0x18] sm:$0xf]
        %v378 = vld [vmem:[%s1 + $0x1c] sm:$0xf]
        %v379 = vld [vmem:[%s1 + $0x20] sm:$0xf]
        %v380 = vld [vmem:[%s1 + $0x24] sm:$0xf]
        %v381 = vld [vmem:[%s1 + $0x28] sm:$0xf]
        %v382 = vld [vmem:[%s1 + $0x2c] sm:$0xf]
        %v383 = vld [vmem:[%s1 + $0x30] sm:$0xf]
        %v384 = vld [vmem:[%s1 + $0x34] sm:$0xf]
        %v385 = vld [vmem:[%s1 + $0x38] sm:$0xf]
        %v386 = vld [vmem:[%s1 + $0x3c] sm:$0xf]
        %v387 = vld [vmem:[%s1 + $0x40] sm:$0xf]
        %v388 = vld [vmem:[%s1 + $0x44] sm:$0xf]
        %v389 = vld [vmem:[%s1 + $0x48] sm:$0xf]
        %v390 = vld [vmem:[%s1 + $0x4c] sm:$0xf]
        %v391 = vld [vmem:[%s1 + $0x50] sm:$0xf]
        %v392 = vld [vmem:[%s1 + $0x54] sm:$0xf]
        %v393 = vld [vmem:[%s1 + $0x58] sm:$0xf]
        %v394 = vld [vmem:[%s1 + $0x5c] sm:$0xf]
        %v395 = vld [vmem:[%s1 + $0x60] sm:$0xf]
        %v396 = vld [vmem:[%s1 + $0x64] sm:$0xf]
        %v397 = vld [vmem:[%s1 + $0x68] sm:$0xf]
        %v398 = vld [vmem:[%s1 + $0x6c] sm:$0xf]
        %v399 = vld [vmem:[%s1 + $0x70] sm:$0xf]
        %v400 = vld [vmem:[%s1 + $0x74] sm:$0xf]
        %v401 = vld [vmem:[%s1 + $0x78] sm:$0xf]
        %v402 = vld [vmem:[%s1 + $0x7c] sm:$0xf]
        %v403 = vld [vmem:[%s1 + $0x80] sm:$0xf]
        %v404 = vld [vmem:[%s1 + $0x84] sm:$0xf]
        %v405 = vld [vmem:[%s1 + $0x88] sm:$0xf]
        %v406 = vld [vmem:[%s1 + $0x8c] sm:$0xf]
        %v407 = vld [vmem:[%s1 + $0x90] sm:$0xf]
        %v408 = vld [vmem:[%s1 + $0x94] sm:$0xf]
        %v409 = vld [vmem:[%s1 + $0x98] sm:$0xf]
        %v410 = vld [vmem:[%s1 + $0x9c] sm:$0xf]
        %v411 = vld [vmem:[%s1 + $0xa0] sm:$0xf]
        %v412 = vld [vmem:[%s1 + $0xa4] sm:$0xf]
        %v413 = vld [vmem:[%s1 + $0xa8] sm:$0xf]
        %v414 = vld [vmem:[%s1 + $0xac] sm:$0xf]
        %v415 = vld [vmem:[%s1 + $0xb0] sm:$0xf]
        %v416 = vld [vmem:[%s1 + $0xb4] sm:$0xf]
        %v417 = vld [vmem:[%s1 + $0xb8] sm:$0xf]
        %v418 = vld [vmem:[%s1 + $0xbc] sm:$0xf]
        %v467 = vunpack.c.l.b16 %v371
        %v468 = vunpack.c.l.b16 %v372
        %v469 = vunpack.c.l.b16 %v373
        %v470 = vunpack.c.l.b16 %v374
        %v471 = vunpack.c.l.b16 %v375
        %v472 = vunpack.c.l.b16 %v376
        %v473 = vunpack.c.l.b16 %v377
        %v474 = vunpack.c.l.b16 %v378
        %v475 = vunpack.c.l.b16 %v379
        %v476 = vunpack.c.l.b16 %v380
        %v477 = vunpack.c.l.b16 %v381
        %v478 = vunpack.c.l.b16 %v382
        %v479 = vunpack.c.l.b16 %v383
        %v480 = vunpack.c.l.b16 %v384
        %v481 = vunpack.c.l.b16 %v385
        %v482 = vunpack.c.l.b16 %v386
        %v483 = vunpack.c.l.b16 %v387
        %v484 = vunpack.c.l.b16 %v388
        %v485 = vunpack.c.l.b16 %v389
        %v486 = vunpack.c.l.b16 %v390
        %v487 = vunpack.c.l.b16 %v391
        %v488 = vunpack.c.l.b16 %v392
        %v489 = vunpack.c.l.b16 %v393
        %v490 = vunpack.c.l.b16 %v394
        %v491 = vunpack.c.l.b16 %v395
        %v492 = vunpack.c.l.b16 %v396
        %v493 = vunpack.c.l.b16 %v397
        %v494 = vunpack.c.l.b16 %v398
        %v495 = vunpack.c.l.b16 %v399
        %v496 = vunpack.c.l.b16 %v400
        %v497 = vunpack.c.l.b16 %v401
        %v498 = vunpack.c.l.b16 %v402
        %v499 = vunpack.c.l.b16 %v403
        %v500 = vunpack.c.l.b16 %v404
        %v501 = vunpack.c.l.b16 %v405
        %v502 = vunpack.c.l.b16 %v406
        %v503 = vunpack.c.l.b16 %v407
        %v504 = vunpack.c.l.b16 %v408
        %v505 = vunpack.c.l.b16 %v409
        %v506 = vunpack.c.l.b16 %v410
        %v507 = vunpack.c.l.b16 %v411
        %v508 = vunpack.c.l.b16 %v412
        %v509 = vunpack.c.l.b16 %v413
        %v510 = vunpack.c.l.b16 %v414
        %v511 = vunpack.c.l.b16 %v415
        %v512 = vunpack.c.l.b16 %v416
        %v513 = vunpack.c.l.b16 %v417
        %v514 = vunpack.c.l.b16 %v418
        %v515 = vpack.c.b16 %v468, %v467
        %v516 = vpack.c.b16 %v470, %v469
        %v517 = vpack.c.b16 %v472, %v471
        %v518 = vpack.c.b16 %v474, %v473
        %v519 = vpack.c.b16 %v476, %v475
        %v520 = vpack.c.b16 %v478, %v477
        %v521 = vpack.c.b16 %v480, %v479
        %v522 = vpack.c.b16 %v482, %v481
        %v523 = vpack.c.b16 %v484, %v483
        %v524 = vpack.c.b16 %v486, %v485
        %v525 = vpack.c.b16 %v488, %v487
        %v526 = vpack.c.b16 %v490, %v489
        %v527 = vpack.c.b16 %v492, %v491
        %v528 = vpack.c.b16 %v494, %v493
        %v529 = vpack.c.b16 %v496, %v495
        %v530 = vpack.c.b16 %v498, %v497
        %v531 = vpack.c.b16 %v500, %v499
        %v532 = vpack.c.b16 %v502, %v501
        %v533 = vpack.c.b16 %v504, %v503
        %v534 = vpack.c.b16 %v506, %v505
        %v535 = vpack.c.b16 %v508, %v507
        %v536 = vpack.c.b16 %v510, %v509
        %v537 = vpack.c.b16 %v512, %v511
        %v538 = vpack.c.b16 %v514, %v513
        %563 = vmatprep.subr.bf16.mxu0 0
        %564 = vmatpush1.bf16.msra.mxu0 %v515
        %565 = vmatprep.subr.bf16.mxu0 0
        %566 = vmatpush1.bf16.msra.mxu0 %v516
        %567 = vmatprep.subr.bf16.mxu0 0
        %568 = vmatpush1.bf16.msra.mxu0 %v517
        %569 = vmatprep.subr.bf16.mxu0 0
        %570 = vmatpush1.bf16.msra.mxu0 %v518
        %571 = vmatprep.subr.bf16.mxu0 0
        %572 = vmatpush1.bf16.msra.mxu0 %v519
        %573 = vmatprep.subr.bf16.mxu0 0
        %574 = vmatpush1.bf16.msra.mxu0 %v520
        %575 = vmatprep.subr.bf16.mxu0 0
        %576 = vmatpush1.bf16.msra.mxu0 %v521
        %577 = vmatprep.subr.bf16.mxu0 0
        %578 = vmatpush1.bf16.msra.mxu0 %v522
        %579 = vmatprep.subr.bf16.mxu0 0
        %580 = vmatpush1.bf16.msra.mxu0 %v523
        %581 = vmatprep.subr.bf16.mxu0 0
        %582 = vmatpush1.bf16.msra.mxu0 %v524
        %583 = vmatprep.subr.bf16.mxu0 0
        %584 = vmatpush1.bf16.msra.mxu0 %v525
        %585 = vmatprep.subr.bf16.mxu0 0
        %586 = vmatpush1.bf16.msra.mxu0 %v526
        %587 = vmatprep.subr.bf16.mxu0 0
        %588 = vmatpush1.bf16.msra.mxu0 %v527
        %589 = vmatprep.subr.bf16.mxu0 0
        %590 = vmatpush1.bf16.msra.mxu0 %v528
        %591 = vmatprep.subr.bf16.mxu0 0
        %592 = vmatpush1.bf16.msra.mxu0 %v529
        %593 = vmatprep.subr.bf16.mxu0 0
        %594 = vmatpush1.bf16.msra.mxu0 %v530
        %595 = vmatprep.mubr.bf16.mxu0 %v365
        %596 = vmatmul.mubr.bf16.gmra.mrb[0].mxu0 %v361
        %v597 = vpop.f32.mrb[0].mxu0
        %v598 = vadd.f32 0.0, %v597
        %v599 = vpop.f32.mrb[0].mxu0
        %v600 = vpop.f32.mrb[0].mxu0
        %v601 = vadd.f32 0.0, %v600
        %v602 = vpop.f32.mrb[0].mxu0
        %603 = vdwg.mxu0
        %604 = vmatprep.subr.bf16.mxu0 0
        %605 = vmatpush1.bf16.msra.mxu0 %v531
        %606 = vmatprep.subr.bf16.mxu0 0
        %607 = vmatpush1.bf16.msra.mxu0 %v532
        %608 = vmatprep.subr.bf16.mxu0 0
        %609 = vmatpush1.bf16.msra.mxu0 %v533
        %610 = vmatprep.subr.bf16.mxu0 0
        %611 = vmatpush1.bf16.msra.mxu0 %v534
        %612 = vmatprep.subr.bf16.mxu0 0
        %613 = vmatpush1.bf16.msra.mxu0 %v535
        %614 = vmatprep.subr.bf16.mxu0 0
        %615 = vmatpush1.bf16.msra.mxu0 %v536
        %616 = vmatprep.subr.bf16.mxu0 0
        %617 = vmatpush1.bf16.msra.mxu0 %v537
        %618 = vmatprep.subr.bf16.mxu0 0
        %619 = vmatpush1.bf16.msra.mxu0 %v538
        %620 = vmatprep.subr.bf16.mxu0 0
        %621 = vmatpush1.bf16.msra.mxu0 0
        %622 = vmatprep.subr.bf16.mxu0 0
        %623 = vmatpush1.bf16.msra.mxu0 0
        %624 = vmatprep.subr.bf16.mxu0 0
        %625 = vmatpush1.bf16.msra.mxu0 0
        %626 = vmatprep.subr.bf16.mxu0 0
        %627 = vmatpush1.bf16.msra.mxu0 0
        %628 = vmatprep.subr.bf16.mxu0 0
        %629 = vmatpush1.bf16.msra.mxu0 0
        %630 = vmatprep.subr.bf16.mxu0 0
        %631 = vmatpush1.bf16.msra.mxu0 0
        %632 = vmatprep.subr.bf16.mxu0 0
        %633 = vmatpush1.bf16.msra.mxu0 0
        %634 = vmatprep.subr.bf16.mxu0 0
        %635 = vmatpush1.bf16.msra.mxu0 0
        %636 = vmatprep.mubr.bf16.mxu0 0
        %637 = vmatmul.mubr.bf16.gmra.mrb[0].mxu0 %v369
        %v638 = vpop.f32.mrb[0].mxu0
        %v639 = vadd.f32 %v598, %v638
        %v640 = vpop.f32.mrb[0].mxu0
        %v641 = vpop.f32.mrb[0].mxu0
        %v642 = vadd.f32 %v601, %v641
        %v643 = vpop.f32.mrb[0].mxu0
        %644 = vdwg.mxu0
        %v645 = vld [vmem:[#allocation2] sm:$0x1]
        %v646 = vadd.f32 %v639, %v642
        %v647 = vrot.slane %v646, 4
        %v648 = vadd.f32 %v646, %v647
        %v649 = vrot.slane %v648, 2
        %v650 = vadd.f32 %v648, %v649
        %v651 = vrot.slane %v650, 1
        %v652 = vadd.f32 %v650, %v651
        %v653 = vadd.f32 %v645, %v652
        %654 = vst [vmem:[#allocation2] sm:$0x1] %v653
        %v655 = vld [vmem:[#allocation2 + $0x1] sm:$0x1]
        %v656 = vmul.f32 %v639, %v639
        %v657 = vmul.f32 %v642, %v642
        %v658 = vadd.f32 %v656, %v657
        %v659 = vrot.slane %v658, 4
        %v660 = vadd.f32 %v658, %v659
        %v661 = vrot.slane %v660, 2
        %v662 = vadd.f32 %v660, %v661
        %v663 = vrot.slane %v662, 1
        %v664 = vadd.f32 %v662, %v663
        %v665 = vadd.f32 %v655, %v664
        %666 = vst [vmem:[#allocation2 + $0x1] sm:$0x1] %v665
        // Predicated region
        $region57: #{residual_block_encoder.2} parent=51 // pred_check
          %p667 = pneg %p311
        $region58: #{residual_block_encoder.2} parent=51 // pred_check_branch
          %669 = sbr.rel (%p667) target = $region60
        $region59: #{residual_block_encoder.2} parent=51 // pred_region
          %v670 = vld [vmem:[#allocation2] sm:$0x3]
          %671 = vrot.lane.b32.xlu0 %v670, 4
          %v672 = vpop.permute.xlu0 %671
          %v673 = vadd.f32 %v670, %v672
          %674 = vrot.lane.b32.xlu0 %v673, 8
          %v675 = vpop.permute.xlu0 %674
          %v676 = vadd.f32 %v673, %v675
          %677 = vrot.lane.b32.xlu0 %v676, 16
          %v678 = vpop.permute.xlu0 %677
          %v679 = vadd.f32 %v676, %v678
          %680 = vrot.lane.b32.xlu0 %v679, 32
          %v681 = vpop.permute.xlu0 %680
          %v682 = vadd.f32 %v679, %v681
          %683 = vrot.lane.b32.xlu0 %v682, 64
          %v684 = vpop.permute.xlu0 %683
          %v685 = vadd.f32 %v682, %v684
          %v686 = vrcp.pop 512.0
          %v687 = vmul.f32 %v685, %v686
          %v688 = vmul.f32 %v687, %v687
          %v690 = vrot.slane %v688, 7
          %v692 = vsub.f32 %v687, %v690
          %v693 = vld [vmem:[%s3] sm:$0x1]
          %v694 = vadd.f32 %v692, 1e-05
          %v695 = vrsqrt.pop %v694
          %v698 = vunpack.c.l.s4 1966171168
          %v699 = vunpack.c.0.s8 %v698
          %v700 = vlaneseq
          %v701 = vshrl.u32 %v700, 7
          %v702 = vsub.s32 %v699, %v701
          %v703 = vrot.slane %v695, %v702
          %v704 = vcombine.high %v703, %v703
          %v706 = vunpack.c.l.s4 1966171168
          %v707 = vunpack.c.0.s8 %v706
          %v708 = vlaneseq
          %v709 = vshrl.u32 %v708, 7
          %v710 = vsub.s32 %v707, %v709
          %v711 = vrot.slane %v704, %v710
          %v713 = vmul.f32 %v693, %v711
          %714 = vst [vmem:[%s7] sm:$0x1] %v713
          %v715 = vld [vmem:[%s4] sm:$0x1]
          %v716 = vmul.f32 %v687, %v713
          %v717 = vsub.f32 %v715, %v716
          %718 = vst [vmem:[%s7 + $0x1] sm:$0x1] %v717
        $region60: #{residual_block_encoder.2} parent=51 // pred_fallthru
          _
      $region52: #{residual_block_encoder.2} parent=47 // pred_fallthru
        _
      %p719 = scmp.eq.s32.totalorder %s24, 1
      // Predicated region
      $region61: #{residual_block_encoder.2} parent=47 // pred_check
        %p720 = pneg %p719
      $region62: #{residual_block_encoder.2} parent=47 // pred_check_branch
        %722 = sbr.rel (%p720) target = $region64
      $region63: #{residual_block_encoder.2} parent=47 // pred_region
        %p723 = scmp.eq.s32.totalorder %s25, 0
        // Predicated region
        $region65: #{residual_block_encoder.2} parent=63 // pred_check
          %p724 = pneg %p723
        $region66: #{residual_block_encoder.2} parent=63 // pred_check_branch
          %726 = sbr.rel (%p724) target = $region68
        $region67: #{residual_block_encoder.2} parent=63 // pred_region
          %727 = vst [vmem:[#allocation3] sm:$0x3] 0.0
        $region68: #{residual_block_encoder.2} parent=63 // pred_fallthru
          _
        %v728 = vld [vmem:[%s304] sm:$0xf]
        %v729 = vld [vmem:[%s304 + $0x4] sm:$0x1]
        %v730 = vld [vmem:[%s304] sm:$0xe]
        %v733 = vunpack.c.l.b16 %v728
        %v734 = vunpack.c.l.b16 %v729
        %v735 = vpack.c.b16 %v734, %v733
        %v737 = vshrl.u32 %v735, 16
        %v739 = vshll.u32 %v735, 16
        %v741 = vrot.slane %v739, 1
        %v742 = vor.u32 %v737, %v741
        %v744 = vunpack.c.l.b16 %v730
        %v745 = vpack.c.b16 %v734, %v744
        %v746 = vrot.slane %v745, 1
        %s747 = scalar_lea.vmem %s304, 8
        %v748 = vld [vmem:[%s747] sm:$0xf]
        %v749 = vld [vmem:[%s747 + $0x4] sm:$0x1]
        %v750 = vld [vmem:[%s747] sm:$0xe]
        %v753 = vunpack.c.l.b16 %v748
        %v754 = vunpack.c.l.b16 %v749
        %v755 = vpack.c.b16 %v754, %v753
        %v757 = vshrl.u32 %v755, 16
        %v759 = vshll.u32 %v755, 16
        %v761 = vrot.slane %v759, 1
        %v762 = vor.u32 %v757, %v761
        %v764 = vunpack.c.l.b16 %v750
        %v765 = vpack.c.b16 %v754, %v764
        %v766 = vrot.slane %v765, 1
        %v767 = vrot.slane %v748, 4
        %v768 = vrot.slane %v762, 4
        %v769 = vrot.slane %v766, 4
        %vm770 = vcmask 1043456
        %v773 = vsel %vm770, %v728, %v767
        %v777 = vsel %vm770, %v742, %v768
        %v781 = vsel %vm770, %v746, %v769
        %v783 = vld [vmem:[%s1] sm:$0xf]
        %v784 = vld [vmem:[%s1 + $0x4] sm:$0xf]
        %v785 = vld [vmem:[%s1 + $0x8] sm:$0xf]
        %v786 = vld [vmem:[%s1 + $0xc] sm:$0xf]
        %v787 = vld [vmem:[%s1 + $0x10] sm:$0xf]
        %v788 = vld [vmem:[%s1 + $0x14] sm:$0xf]
        %v789 = vld [vmem:[%s1 + $0x18] sm:$0xf]
        %v790 = vld [vmem:[%s1 + $0x1c] sm:$0xf]
        %v791 = vld [vmem:[%s1 + $0x20] sm:$0xf]
        %v792 = vld [vmem:[%s1 + $0x24] sm:$0xf]
        %v793 = vld [vmem:[%s1 + $0x28] sm:$0xf]
        %v794 = vld [vmem:[%s1 + $0x2c] sm:$0xf]
        %v795 = vld [vmem:[%s1 + $0x30] sm:$0xf]
        %v796 = vld [vmem:[%s1 + $0x34] sm:$0xf]
        %v797 = vld [vmem:[%s1 + $0x38] sm:$0xf]
        %v798 = vld [vmem:[%s1 + $0x3c] sm:$0xf]
        %v799 = vld [vmem:[%s1 + $0x40] sm:$0xf]
        %v800 = vld [vmem:[%s1 + $0x44] sm:$0xf]
        %v801 = vld [vmem:[%s1 + $0x48] sm:$0xf]
        %v802 = vld [vmem:[%s1 + $0x4c] sm:$0xf]
        %v803 = vld [vmem:[%s1 + $0x50] sm:$0xf]
        %v804 = vld [vmem:[%s1 + $0x54] sm:$0xf]
        %v805 = vld [vmem:[%s1 + $0x58] sm:$0xf]
        %v806 = vld [vmem:[%s1 + $0x5c] sm:$0xf]
        %v807 = vld [vmem:[%s1 + $0x60] sm:$0xf]
        %v808 = vld [vmem:[%s1 + $0x64] sm:$0xf]
        %v809 = vld [vmem:[%s1 + $0x68] sm:$0xf]
        %v810 = vld [vmem:[%s1 + $0x6c] sm:$0xf]
        %v811 = vld [vmem:[%s1 + $0x70] sm:$0xf]
        %v812 = vld [vmem:[%s1 + $0x74] sm:$0xf]
        %v813 = vld [vmem:[%s1 + $0x78] sm:$0xf]
        %v814 = vld [vmem:[%s1 + $0x7c] sm:$0xf]
        %v815 = vld [vmem:[%s1 + $0x80] sm:$0xf]
        %v816 = vld [vmem:[%s1 + $0x84] sm:$0xf]
        %v817 = vld [vmem:[%s1 + $0x88] sm:$0xf]
        %v818 = vld [vmem:[%s1 + $0x8c] sm:$0xf]
        %v819 = vld [vmem:[%s1 + $0x90] sm:$0xf]
        %v820 = vld [vmem:[%s1 + $0x94] sm:$0xf]
        %v821 = vld [vmem:[%s1 + $0x98] sm:$0xf]
        %v822 = vld [vmem:[%s1 + $0x9c] sm:$0xf]
        %v823 = vld [vmem:[%s1 + $0xa0] sm:$0xf]
        %v824 = vld [vmem:[%s1 + $0xa4] sm:$0xf]
        %v825 = vld [vmem:[%s1 + $0xa8] sm:$0xf]
        %v826 = vld [vmem:[%s1 + $0xac] sm:$0xf]
        %v827 = vld [vmem:[%s1 + $0xb0] sm:$0xf]
        %v828 = vld [vmem:[%s1 + $0xb4] sm:$0xf]
        %v829 = vld [vmem:[%s1 + $0xb8] sm:$0xf]
        %v830 = vld [vmem:[%s1 + $0xbc] sm:$0xf]
        %v879 = vunpack.c.l.b16 %v783
        %v880 = vunpack.c.l.b16 %v784
        %v881 = vunpack.c.l.b16 %v785
        %v882 = vunpack.c.l.b16 %v786
        %v883 = vunpack.c.l.b16 %v787
        %v884 = vunpack.c.l.b16 %v788
        %v885 = vunpack.c.l.b16 %v789
        %v886 = vunpack.c.l.b16 %v790
        %v887 = vunpack.c.l.b16 %v791
        %v888 = vunpack.c.l.b16 %v792
        %v889 = vunpack.c.l.b16 %v793
        %v890 = vunpack.c.l.b16 %v794
        %v891 = vunpack.c.l.b16 %v795
        %v892 = vunpack.c.l.b16 %v796
        %v893 = vunpack.c.l.b16 %v797
        %v894 = vunpack.c.l.b16 %v798
        %v895 = vunpack.c.l.b16 %v799
        %v896 = vunpack.c.l.b16 %v800
        %v897 = vunpack.c.l.b16 %v801
        %v898 = vunpack.c.l.b16 %v802
        %v899 = vunpack.c.l.b16 %v803
        %v900 = vunpack.c.l.b16 %v804
        %v901 = vunpack.c.l.b16 %v805
        %v902 = vunpack.c.l.b16 %v806
        %v903 = vunpack.c.l.b16 %v807
        %v904 = vunpack.c.l.b16 %v808
        %v905 = vunpack.c.l.b16 %v809
        %v906 = vunpack.c.l.b16 %v810
        %v907 = vunpack.c.l.b16 %v811
        %v908 = vunpack.c.l.b16 %v812
        %v909 = vunpack.c.l.b16 %v813
        %v910 = vunpack.c.l.b16 %v814
        %v911 = vunpack.c.l.b16 %v815
        %v912 = vunpack.c.l.b16 %v816
        %v913 = vunpack.c.l.b16 %v817
        %v914 = vunpack.c.l.b16 %v818
        %v915 = vunpack.c.l.b16 %v819
        %v916 = vunpack.c.l.b16 %v820
        %v917 = vunpack.c.l.b16 %v821
        %v918 = vunpack.c.l.b16 %v822
        %v919 = vunpack.c.l.b16 %v823
        %v920 = vunpack.c.l.b16 %v824
        %v921 = vunpack.c.l.b16 %v825
        %v922 = vunpack.c.l.b16 %v826
        %v923 = vunpack.c.l.b16 %v827
        %v924 = vunpack.c.l.b16 %v828
        %v925 = vunpack.c.l.b16 %v829
        %v926 = vunpack.c.l.b16 %v830
        %v927 = vpack.c.b16 %v880, %v879
        %v928 = vpack.c.b16 %v882, %v881
        %v929 = vpack.c.b16 %v884, %v883
        %v930 = vpack.c.b16 %v886, %v885
        %v931 = vpack.c.b16 %v888, %v887
        %v932 = vpack.c.b16 %v890, %v889
        %v933 = vpack.c.b16 %v892, %v891
        %v934 = vpack.c.b16 %v894, %v893
        %v935 = vpack.c.b16 %v896, %v895
        %v936 = vpack.c.b16 %v898, %v897
        %v937 = vpack.c.b16 %v900, %v899
        %v938 = vpack.c.b16 %v902, %v901
        %v939 = vpack.c.b16 %v904, %v903
        %v940 = vpack.c.b16 %v906, %v905
        %v941 = vpack.c.b16 %v908, %v907
        %v942 = vpack.c.b16 %v910, %v909
        %v943 = vpack.c.b16 %v912, %v911
        %v944 = vpack.c.b16 %v914, %v913
        %v945 = vpack.c.b16 %v916, %v915
        %v946 = vpack.c.b16 %v918, %v917
        %v947 = vpack.c.b16 %v920, %v919
        %v948 = vpack.c.b16 %v922, %v921
        %v949 = vpack.c.b16 %v924, %v923
        %v950 = vpack.c.b16 %v926, %v925
        %975 = vmatprep.subr.bf16.mxu0 0
        %976 = vmatpush1.bf16.msra.mxu0 %v927
        %977 = vmatprep.subr.bf16.mxu0 0
        %978 = vmatpush1.bf16.msra.mxu0 %v928
        %979 = vmatprep.subr.bf16.mxu0 0
        %980 = vmatpush1.bf16.msra.mxu0 %v929
        %981 = vmatprep.subr.bf16.mxu0 0
        %982 = vmatpush1.bf16.msra.mxu0 %v930
        %983 = vmatprep.subr.bf16.mxu0 0
        %984 = vmatpush1.bf16.msra.mxu0 %v931
        %985 = vmatprep.subr.bf16.mxu0 0
        %986 = vmatpush1.bf16.msra.mxu0 %v932
        %987 = vmatprep.subr.bf16.mxu0 0
        %988 = vmatpush1.bf16.msra.mxu0 %v933
        %989 = vmatprep.subr.bf16.mxu0 0
        %990 = vmatpush1.bf16.msra.mxu0 %v934
        %991 = vmatprep.subr.bf16.mxu0 0
        %992 = vmatpush1.bf16.msra.mxu0 %v935
        %993 = vmatprep.subr.bf16.mxu0 0
        %994 = vmatpush1.bf16.msra.mxu0 %v936
        %995 = vmatprep.subr.bf16.mxu0 0
        %996 = vmatpush1.bf16.msra.mxu0 %v937
        %997 = vmatprep.subr.bf16.mxu0 0
        %998 = vmatpush1.bf16.msra.mxu0 %v938
        %999 = vmatprep.subr.bf16.mxu0 0
        %1000 = vmatpush1.bf16.msra.mxu0 %v939
        %1001 = vmatprep.subr.bf16.mxu0 0
        %1002 = vmatpush1.bf16.msra.mxu0 %v940
        %1003 = vmatprep.subr.bf16.mxu0 0
        %1004 = vmatpush1.bf16.msra.mxu0 %v941
        %1005 = vmatprep.subr.bf16.mxu0 0
        %1006 = vmatpush1.bf16.msra.mxu0 %v942
        %1007 = vmatprep.mubr.bf16.mxu0 %v777
        %1008 = vmatmul.mubr.bf16.gmra.mrb[0].mxu0 %v773
        %v1009 = vpop.f32.mrb[0].mxu0
        %v1010 = vadd.f32 0.0, %v1009
        %v1011 = vpop.f32.mrb[0].mxu0
        %v1012 = vpop.f32.mrb[0].mxu0
        %v1013 = vadd.f32 0.0, %v1012
        %v1014 = vpop.f32.mrb[0].mxu0
        %1015 = vdwg.mxu0
        %1016 = vmatprep.subr.bf16.mxu0 0
        %1017 = vmatpush1.bf16.msra.mxu0 %v943
        %1018 = vmatprep.subr.bf16.mxu0 0
        %1019 = vmatpush1.bf16.msra.mxu0 %v944
        %1020 = vmatprep.subr.bf16.mxu0 0
        %1021 = vmatpush1.bf16.msra.mxu0 %v945
        %1022 = vmatprep.subr.bf16.mxu0 0
        %1023 = vmatpush1.bf16.msra.mxu0 %v946
        %1024 = vmatprep.subr.bf16.mxu0 0
        %1025 = vmatpush1.bf16.msra.mxu0 %v947
        %1026 = vmatprep.subr.bf16.mxu0 0
        %1027 = vmatpush1.bf16.msra.mxu0 %v948
        %1028 = vmatprep.subr.bf16.mxu0 0
        %1029 = vmatpush1.bf16.msra.mxu0 %v949
        %1030 = vmatprep.subr.bf16.mxu0 0
        %1031 = vmatpush1.bf16.msra.mxu0 %v950
        %1032 = vmatprep.subr.bf16.mxu0 0
        %1033 = vmatpush1.bf16.msra.mxu0 0
        %1034 = vmatprep.subr.bf16.mxu0 0
        %1035 = vmatpush1.bf16.msra.mxu0 0
        %1036 = vmatprep.subr.bf16.mxu0 0
        %1037 = vmatpush1.bf16.msra.mxu0 0
        %1038 = vmatprep.subr.bf16.mxu0 0
        %1039 = vmatpush1.bf16.msra.mxu0 0
        %1040 = vmatprep.subr.bf16.mxu0 0
        %1041 = vmatpush1.bf16.msra.mxu0 0
        %1042 = vmatprep.subr.bf16.mxu0 0
        %1043 = vmatpush1.bf16.msra.mxu0 0
        %1044 = vmatprep.subr.bf16.mxu0 0
        %1045 = vmatpush1.bf16.msra.mxu0 0
        %1046 = vmatprep.subr.bf16.mxu0 0
        %1047 = vmatpush1.bf16.msra.mxu0 0
        %1048 = vmatprep.mubr.bf16.mxu0 0
        %1049 = vmatmul.mubr.bf16.gmra.mrb[0].mxu0 %v781
        %v1050 = vpop.f32.mrb[0].mxu0
        %v1051 = vadd.f32 %v1010, %v1050
        %v1052 = vpop.f32.mrb[0].mxu0
        %v1053 = vpop.f32.mrb[0].mxu0
        %v1054 = vadd.f32 %v1013, %v1053
        %v1055 = vpop.f32.mrb[0].mxu0
        %1056 = vdwg.mxu0
        %v1057 = vld [vmem:[%s7] sm:$0x1]
        %v1058 = vlaneseq
        %v1059 = vshrl.u32 %v1058, 7
        %v1060 = vsub.s32 0, %v1059
        %v1061 = vrot.slane %v1057, %v1060
        %v1062 = vmul.f32 %v1051, %v1061
        %v1063 = vmul.f32 %v1054, %v1061
        %v1064 = vld [vmem:[%s7 + $0x1] sm:$0x1]
        %v1065 = vlaneseq
        %v1066 = vshrl.u32 %v1065, 7
        %v1067 = vsub.s32 0, %v1066
        %v1068 = vrot.slane %v1064, %v1067
        %v1069 = vadd.f32 %v1062, %v1068
        %v1070 = vadd.f32 %v1063, %v1068
        %vm1071 = vcmp.ge.f32.partialorder %v1069, 0.0
        %vm1072 = vcmp.ge.f32.partialorder %v1070, 0.0
        %v1073 = vmul.f32 %v1069, 0.2
        %v1074 = vmul.f32 %v1070, 0.2
        %v1075 = vsel %vm1071, %v1069, %v1073
        %v1076 = vsel %vm1072, %v1070, %v1074
        %vm1077 = vcmask 1040384
        %vm1078 = vsmask.f32 256
        %vm1079 = vmand %vm1077, %vm1078
        %v1080 = vld [vmem:[#allocation4] sm:$0x1]
        %v1081 = vsel %vm1079, 0, %v1080
        %1082 = vst [vmem:[#allocation4] sm:$0x1] %v1081
        %v1083 = vld [vmem:[#allocation4 + $0x8] sm:$0x1]
        %v1084 = vsel %vm1079, 0, %v1083
        %1085 = vst [vmem:[#allocation4 + $0x8] sm:$0x1] %v1084
        %vm1086 = vsmask.f32 7938
        %vm1087 = vmand %vm1077, %vm1086
        %v1088 = vld [vmem:[#allocation4 + $0x4] sm:$0x1]
        %v1089 = vsel %vm1087, 0, %v1088
        %1090 = vst [vmem:[#allocation4 + $0x4] sm:$0x1] %v1089
        %v1091 = vld [vmem:[#allocation4 + $0xc] sm:$0x1]
        %v1092 = vsel %vm1087, 0, %v1091
        %1093 = vst [vmem:[#allocation4 + $0xc] sm:$0x1] %v1092
        %v1094 = vpack.c.bf16 %v1076, %v1075
        %v1096 = vunpack.c.l.b16 %v1094
        %v1097 = vunpack.c.h.b16 %v1094
        %v1098 = vpack.c.b16 %v1096, %v1096
        %v1099 = vpack.c.b16 %v1097, %v1097
        %v1101 = vshrl.u32 %v1098, 16
        %v1103 = vrot.slane %v1101, 7
        %v1104 = vshll.u32 %v1098, 16
        %v1106 = vor.u32 %v1103, %v1104
        %v1107 = vrot.slane %v1103, 4
        %v1109 = vshrl.u32 %v1099, 16
        %v1111 = vrot.slane %v1109, 7
        %v1112 = vshll.u32 %v1099, 16
        %v1114 = vor.u32 %v1111, %v1112
        %v1115 = vrot.slane %v1111, 4
        %vm1120 = vcmask 1043456
        %vm1121 = vmand %vm1120, %vm1086
        %v1122 = vld [vmem:[#allocation4] sm:$0xf]
        %v1123 = vsel %vm1121, %v1106, %v1122
        %1124 = vst [vmem:[#allocation4] sm:$0xf] %v1123
        %v1125 = vld [vmem:[#allocation4 + $0x4] sm:$0x1]
        %v1126 = vsel %vm1079, %v1107, %v1125
        %1127 = vst [vmem:[#allocation4 + $0x4] sm:$0x1] %v1126
        %v1128 = vld [vmem:[#allocation4 + $0x8] sm:$0xf]
        %v1129 = vsel %vm1121, %v1114, %v1128
        %1130 = vst [vmem:[#allocation4 + $0x8] sm:$0xf] %v1129
        %v1131 = vld [vmem:[#allocation4 + $0xc] sm:$0x1]
        %v1132 = vsel %vm1079, %v1115, %v1131
        %1133 = vst [vmem:[#allocation4 + $0xc] sm:$0x1] %v1132
        %v1134 = vld [vmem:[#allocation4] sm:$0xf]
        %v1135 = vld [vmem:[#allocation4 + $0x4] sm:$0x1]
        %v1136 = vld [vmem:[#allocation4] sm:$0xe]
        %v1139 = vunpack.c.l.b16 %v1134
        %v1140 = vunpack.c.l.b16 %v1135
        %v1141 = vpack.c.b16 %v1140, %v1139
        %v1143 = vshrl.u32 %v1141, 16
        %v1145 = vshll.u32 %v1141, 16
        %v1147 = vrot.slane %v1145, 1
        %v1148 = vor.u32 %v1143, %v1147
        %v1150 = vunpack.c.l.b16 %v1136
        %v1151 = vpack.c.b16 %v1140, %v1150
        %v1152 = vrot.slane %v1151, 1
        %s1153 = scalar_lea.vmem [#allocation4], 8
        %v1154 = vld [vmem:[%s1153] sm:$0xf]
        %v1155 = vld [vmem:[%s1153 + $0x4] sm:$0x1]
        %v1156 = vld [vmem:[%s1153] sm:$0xe]
        %v1159 = vunpack.c.l.b16 %v1154
        %v1160 = vunpack.c.l.b16 %v1155
        %v1161 = vpack.c.b16 %v1160, %v1159
        %v1163 = vshrl.u32 %v1161, 16
        %v1165 = vshll.u32 %v1161, 16
        %v1167 = vrot.slane %v1165, 1
        %v1168 = vor.u32 %v1163, %v1167
        %v1170 = vunpack.c.l.b16 %v1156
        %v1171 = vpack.c.b16 %v1160, %v1170
        %v1172 = vrot.slane %v1171, 1
        %v1173 = vrot.slane %v1154, 4
        %v1174 = vrot.slane %v1168, 4
        %v1175 = vrot.slane %v1172, 4
        %v1178 = vsel %vm770, %v1134, %v1173
        %v1182 = vsel %vm770, %v1148, %v1174
        %v1186 = vsel %vm770, %v1152, %v1175
        %v1188 = vld [vmem:[%s2] sm:$0xf]
        %v1189 = vld [vmem:[%s2 + $0x4] sm:$0xf]
        %v1190 = vld [vmem:[%s2 + $0x8] sm:$0xf]
        %v1191 = vld [vmem:[%s2 + $0xc] sm:$0xf]
        %v1192 = vld [vmem:[%s2 + $0x10] sm:$0xf]
        %v1193 = vld [vmem:[%s2 + $0x14] sm:$0xf]
        %v1194 = vld [vmem:[%s2 + $0x18] sm:$0xf]
        %v1195 = vld [vmem:[%s2 + $0x1c] sm:$0xf]
        %v1196 = vld [vmem:[%s2 + $0x20] sm:$0xf]
        %v1197 = vld [vmem:[%s2 + $0x24] sm:$0xf]
        %v1198 = vld [vmem:[%s2 + $0x28] sm:$0xf]
        %v1199 = vld [vmem:[%s2 + $0x2c] sm:$0xf]
        %v1200 = vld [vmem:[%s2 + $0x30] sm:$0xf]
        %v1201 = vld [vmem:[%s2 + $0x34] sm:$0xf]
        %v1202 = vld [vmem:[%s2 + $0x38] sm:$0xf]
        %v1203 = vld [vmem:[%s2 + $0x3c] sm:$0xf]
        %v1204 = vld [vmem:[%s2 + $0x40] sm:$0xf]
        %v1205 = vld [vmem:[%s2 + $0x44] sm:$0xf]
        %v1206 = vld [vmem:[%s2 + $0x48] sm:$0xf]
        %v1207 = vld [vmem:[%s2 + $0x4c] sm:$0xf]
        %v1208 = vld [vmem:[%s2 + $0x50] sm:$0xf]
        %v1209 = vld [vmem:[%s2 + $0x54] sm:$0xf]
        %v1210 = vld [vmem:[%s2 + $0x58] sm:$0xf]
        %v1211 = vld [vmem:[%s2 + $0x5c] sm:$0xf]
        %v1212 = vld [vmem:[%s2 + $0x60] sm:$0xf]
        %v1213 = vld [vmem:[%s2 + $0x64] sm:$0xf]
        %v1214 = vld [vmem:[%s2 + $0x68] sm:$0xf]
        %v1215 = vld [vmem:[%s2 + $0x6c] sm:$0xf]
        %v1216 = vld [vmem:[%s2 + $0x70] sm:$0xf]
        %v1217 = vld [vmem:[%s2 + $0x74] sm:$0xf]
        %v1218 = vld [vmem:[%s2 + $0x78] sm:$0xf]
        %v1219 = vld [vmem:[%s2 + $0x7c] sm:$0xf]
        %v1220 = vld [vmem:[%s2 + $0x80] sm:$0xf]
        %v1221 = vld [vmem:[%s2 + $0x84] sm:$0xf]
        %v1222 = vld [vmem:[%s2 + $0x88] sm:$0xf]
        %v1223 = vld [vmem:[%s2 + $0x8c] sm:$0xf]
        %v1224 = vld [vmem:[%s2 + $0x90] sm:$0xf]
        %v1225 = vld [vmem:[%s2 + $0x94] sm:$0xf]
        %v1226 = vld [vmem:[%s2 + $0x98] sm:$0xf]
        %v1227 = vld [vmem:[%s2 + $0x9c] sm:$0xf]
        %v1228 = vld [vmem:[%s2 + $0xa0] sm:$0xf]
        %v1229 = vld [vmem:[%s2 + $0xa4] sm:$0xf]
        %v1230 = vld [vmem:[%s2 + $0xa8] sm:$0xf]
        %v1231 = vld [vmem:[%s2 + $0xac] sm:$0xf]
        %v1232 = vld [vmem:[%s2 + $0xb0] sm:$0xf]
        %v1233 = vld [vmem:[%s2 + $0xb4] sm:$0xf]
        %v1234 = vld [vmem:[%s2 + $0xb8] sm:$0xf]
        %v1235 = vld [vmem:[%s2 + $0xbc] sm:$0xf]
        %v1284 = vunpack.c.l.b16 %v1188
        %v1285 = vunpack.c.l.b16 %v1189
        %v1286 = vunpack.c.l.b16 %v1190
        %v1287 = vunpack.c.l.b16 %v1191
        %v1288 = vunpack.c.l.b16 %v1192
        %v1289 = vunpack.c.l.b16 %v1193
        %v1290 = vunpack.c.l.b16 %v1194
        %v1291 = vunpack.c.l.b16 %v1195
        %v1292 = vunpack.c.l.b16 %v1196
        %v1293 = vunpack.c.l.b16 %v1197
        %v1294 = vunpack.c.l.b16 %v1198
        %v1295 = vunpack.c.l.b16 %v1199
        %v1296 = vunpack.c.l.b16 %v1200
        %v1297 = vunpack.c.l.b16 %v1201
        %v1298 = vunpack.c.l.b16 %v1202
        %v1299 = vunpack.c.l.b16 %v1203
        %v1300 = vunpack.c.l.b16 %v1204
        %v1301 = vunpack.c.l.b16 %v1205
        %v1302 = vunpack.c.l.b16 %v1206
        %v1303 = vunpack.c.l.b16 %v1207
        %v1304 = vunpack.c.l.b16 %v1208
        %v1305 = vunpack.c.l.b16 %v1209
        %v1306 = vunpack.c.l.b16 %v1210
        %v1307 = vunpack.c.l.b16 %v1211
        %v1308 = vunpack.c.l.b16 %v1212
        %v1309 = vunpack.c.l.b16 %v1213
        %v1310 = vunpack.c.l.b16 %v1214
        %v1311 = vunpack.c.l.b16 %v1215
        %v1312 = vunpack.c.l.b16 %v1216
        %v1313 = vunpack.c.l.b16 %v1217
        %v1314 = vunpack.c.l.b16 %v1218
        %v1315 = vunpack.c.l.b16 %v1219
        %v1316 = vunpack.c.l.b16 %v1220
        %v1317 = vunpack.c.l.b16 %v1221
        %v1318 = vunpack.c.l.b16 %v1222
        %v1319 = vunpack.c.l.b16 %v1223
        %v1320 = vunpack.c.l.b16 %v1224
        %v1321 = vunpack.c.l.b16 %v1225
        %v1322 = vunpack.c.l.b16 %v1226
        %v1323 = vunpack.c.l.b16 %v1227
        %v1324 = vunpack.c.l.b16 %v1228
        %v1325 = vunpack.c.l.b16 %v1229
        %v1326 = vunpack.c.l.b16 %v1230
        %v1327 = vunpack.c.l.b16 %v1231
        %v1328 = vunpack.c.l.b16 %v1232
        %v1329 = vunpack.c.l.b16 %v1233
        %v1330 = vunpack.c.l.b16 %v1234
        %v1331 = vunpack.c.l.b16 %v1235
        %v1332 = vpack.c.b16 %v1285, %v1284
        %v1333 = vpack.c.b16 %v1287, %v1286
        %v1334 = vpack.c.b16 %v1289, %v1288
        %v1335 = vpack.c.b16 %v1291, %v1290
        %v1336 = vpack.c.b16 %v1293, %v1292
        %v1337 = vpack.c.b16 %v1295, %v1294
        %v1338 = vpack.c.b16 %v1297, %v1296
        %v1339 = vpack.c.b16 %v1299, %v1298
        %v1340 = vpack.c.b16 %v1301, %v1300
        %v1341 = vpack.c.b16 %v1303, %v1302
        %v1342 = vpack.c.b16 %v1305, %v1304
        %v1343 = vpack.c.b16 %v1307, %v1306
        %v1344 = vpack.c.b16 %v1309, %v1308
        %v1345 = vpack.c.b16 %v1311, %v1310
        %v1346 = vpack.c.b16 %v1313, %v1312
        %v1347 = vpack.c.b16 %v1315, %v1314
        %v1348 = vpack.c.b16 %v1317, %v1316
        %v1349 = vpack.c.b16 %v1319, %v1318
        %v1350 = vpack.c.b16 %v1321, %v1320
        %v1351 = vpack.c.b16 %v1323, %v1322
        %v1352 = vpack.c.b16 %v1325, %v1324
        %v1353 = vpack.c.b16 %v1327, %v1326
        %v1354 = vpack.c.b16 %v1329, %v1328
        %v1355 = vpack.c.b16 %v1331, %v1330
        %1380 = vmatprep.subr.bf16.mxu0 0
        %1381 = vmatpush1.bf16.msra.mxu0 %v1332
        %1382 = vmatprep.subr.bf16.mxu0 0
        %1383 = vmatpush1.bf16.msra.mxu0 %v1333
        %1384 = vmatprep.subr.bf16.mxu0 0
        %1385 = vmatpush1.bf16.msra.mxu0 %v1334
        %1386 = vmatprep.subr.bf16.mxu0 0
        %1387 = vmatpush1.bf16.msra.mxu0 %v1335
        %1388 = vmatprep.subr.bf16.mxu0 0
        %1389 = vmatpush1.bf16.msra.mxu0 %v1336
        %1390 = vmatprep.subr.bf16.mxu0 0
        %1391 = vmatpush1.bf16.msra.mxu0 %v1337
        %1392 = vmatprep.subr.bf16.mxu0 0
        %1393 = vmatpush1.bf16.msra.mxu0 %v1338
        %1394 = vmatprep.subr.bf16.mxu0 0
        %1395 = vmatpush1.bf16.msra.mxu0 %v1339
        %1396 = vmatprep.subr.bf16.mxu0 0
        %1397 = vmatpush1.bf16.msra.mxu0 %v1340
        %1398 = vmatprep.subr.bf16.mxu0 0
        %1399 = vmatpush1.bf16.msra.mxu0 %v1341
        %1400 = vmatprep.subr.bf16.mxu0 0
        %1401 = vmatpush1.bf16.msra.mxu0 %v1342
        %1402 = vmatprep.subr.bf16.mxu0 0
        %1403 = vmatpush1.bf16.msra.mxu0 %v1343
        %1404 = vmatprep.subr.bf16.mxu0 0
        %1405 = vmatpush1.bf16.msra.mxu0 %v1344
        %1406 = vmatprep.subr.bf16.mxu0 0
        %1407 = vmatpush1.bf16.msra.mxu0 %v1345
        %1408 = vmatprep.subr.bf16.mxu0 0
        %1409 = vmatpush1.bf16.msra.mxu0 %v1346
        %1410 = vmatprep.subr.bf16.mxu0 0
        %1411 = vmatpush1.bf16.msra.mxu0 %v1347
        %1412 = vmatprep.mubr.bf16.mxu0 %v1182
        %1413 = vmatmul.mubr.bf16.gmra.mrb[0].mxu0 %v1178
        %v1414 = vpop.f32.mrb[0].mxu0
        %v1415 = vadd.f32 0.0, %v1414
        %v1416 = vpop.f32.mrb[0].mxu0
        %v1417 = vpop.f32.mrb[0].mxu0
        %v1418 = vadd.f32 0.0, %v1417
        %v1419 = vpop.f32.mrb[0].mxu0
        %1420 = vdwg.mxu0
        %1421 = vmatprep.subr.bf16.mxu0 0
        %1422 = vmatpush1.bf16.msra.mxu0 %v1348
        %1423 = vmatprep.subr.bf16.mxu0 0
        %1424 = vmatpush1.bf16.msra.mxu0 %v1349
        %1425 = vmatprep.subr.bf16.mxu0 0
        %1426 = vmatpush1.bf16.msra.mxu0 %v1350
        %1427 = vmatprep.subr.bf16.mxu0 0
        %1428 = vmatpush1.bf16.msra.mxu0 %v1351
        %1429 = vmatprep.subr.bf16.mxu0 0
        %1430 = vmatpush1.bf16.msra.mxu0 %v1352
        %1431 = vmatprep.subr.bf16.mxu0 0
        %1432 = vmatpush1.bf16.msra.mxu0 %v1353
        %1433 = vmatprep.subr.bf16.mxu0 0
        %1434 = vmatpush1.bf16.msra.mxu0 %v1354
        %1435 = vmatprep.subr.bf16.mxu0 0
        %1436 = vmatpush1.bf16.msra.mxu0 %v1355
        %1437 = vmatprep.subr.bf16.mxu0 0
        %1438 = vmatpush1.bf16.msra.mxu0 0
        %1439 = vmatprep.subr.bf16.mxu0 0
        %1440 = vmatpush1.bf16.msra.mxu0 0
        %1441 = vmatprep.subr.bf16.mxu0 0
        %1442 = vmatpush1.bf16.msra.mxu0 0
        %1443 = vmatprep.subr.bf16.mxu0 0
        %1444 = vmatpush1.bf16.msra.mxu0 0
        %1445 = vmatprep.subr.bf16.mxu0 0
        %1446 = vmatpush1.bf16.msra.mxu0 0
        %1447 = vmatprep.subr.bf16.mxu0 0
        %1448 = vmatpush1.bf16.msra.mxu0 0
        %1449 = vmatprep.subr.bf16.mxu0 0
        %1450 = vmatpush1.bf16.msra.mxu0 0
        %1451 = vmatprep.subr.bf16.mxu0 0
        %1452 = vmatpush1.bf16.msra.mxu0 0
        %1453 = vmatprep.mubr.bf16.mxu0 0
        %1454 = vmatmul.mubr.bf16.gmra.mrb[0].mxu0 %v1186
        %v1455 = vpop.f32.mrb[0].mxu0
        %v1456 = vadd.f32 %v1415, %v1455
        %v1457 = vpop.f32.mrb[0].mxu0
        %v1458 = vpop.f32.mrb[0].mxu0
        %v1459 = vadd.f32 %v1418, %v1458
        %v1460 = vpop.f32.mrb[0].mxu0
        %1461 = vdwg.mxu0
        %v1462 = vld [vmem:[#allocation3] sm:$0x1]
        %v1463 = vadd.f32 %v1456, %v1459
        %v1464 = vrot.slane %v1463, 4
        %v1465 = vadd.f32 %v1463, %v1464
        %v1466 = vrot.slane %v1465, 2
        %v1467 = vadd.f32 %v1465, %v1466
        %v1468 = vrot.slane %v1467, 1
        %v1469 = vadd.f32 %v1467, %v1468
        %v1470 = vadd.f32 %v1462, %v1469
        %1471 = vst [vmem:[#allocation3] sm:$0x1] %v1470
        %v1472 = vld [vmem:[#allocation3 + $0x1] sm:$0x1]
        %v1473 = vmul.f32 %v1456, %v1456
        %v1474 = vmul.f32 %v1459, %v1459
        %v1475 = vadd.f32 %v1473, %v1474
        %v1476 = vrot.slane %v1475, 4
        %v1477 = vadd.f32 %v1475, %v1476
        %v1478 = vrot.slane %v1477, 2
        %v1479 = vadd.f32 %v1477, %v1478
        %v1480 = vrot.slane %v1479, 1
        %v1481 = vadd.f32 %v1479, %v1480
        %v1482 = vadd.f32 %v1472, %v1481
        %1483 = vst [vmem:[#allocation3 + $0x1] sm:$0x1] %v1482
        // Predicated region
        $region69: #{residual_block_encoder.2} parent=63 // pred_check
          %p1484 = pneg %p723
        $region70: #{residual_block_encoder.2} parent=63 // pred_check_branch
          %1486 = sbr.rel (%p1484) target = $region72
        $region71: #{residual_block_encoder.2} parent=63 // pred_region
          %v1487 = vld [vmem:[#allocation3] sm:$0x3]
          %1488 = vrot.lane.b32.xlu0 %v1487, 4
          %v1489 = vpop.permute.xlu0 %1488
          %v1490 = vadd.f32 %v1487, %v1489
          %1491 = vrot.lane.b32.xlu0 %v1490, 8
          %v1492 = vpop.permute.xlu0 %1491
          %v1493 = vadd.f32 %v1490, %v1492
          %1494 = vrot.lane.b32.xlu0 %v1493, 16
          %v1495 = vpop.permute.xlu0 %1494
          %v1496 = vadd.f32 %v1493, %v1495
          %1497 = vrot.lane.b32.xlu0 %v1496, 32
          %v1498 = vpop.permute.xlu0 %1497
          %v1499 = vadd.f32 %v1496, %v1498
          %1500 = vrot.lane.b32.xlu0 %v1499, 64
          %v1501 = vpop.permute.xlu0 %1500
          %v1502 = vadd.f32 %v1499, %v1501
          %v1503 = vrcp.pop 512.0
          %v1504 = vmul.f32 %v1502, %v1503
          %v1505 = vmul.f32 %v1504, %v1504
          %v1507 = vrot.slane %v1505, 7
          %v1509 = vsub.f32 %v1504, %v1507
          %v1510 = vld [vmem:[%s5] sm:$0x1]
          %v1511 = vadd.f32 %v1509, 1e-05
          %v1512 = vrsqrt.pop %v1511
          %v1515 = vunpack.c.l.s4 1966171168
          %v1516 = vunpack.c.0.s8 %v1515
          %v1517 = vlaneseq
          %v1518 = vshrl.u32 %v1517, 7
          %v1519 = vsub.s32 %v1516, %v1518
          %v1520 = vrot.slane %v1512, %v1519
          %v1521 = vcombine.high %v1520, %v1520
          %v1523 = vunpack.c.l.s4 1966171168
          %v1524 = vunpack.c.0.s8 %v1523
          %v1525 = vlaneseq
          %v1526 = vshrl.u32 %v1525, 7
          %v1527 = vsub.s32 %v1524, %v1526
          %v1528 = vrot.slane %v1521, %v1527
          %v1530 = vmul.f32 %v1510, %v1528
          %1531 = vst [vmem:[%s8] sm:$0x1] %v1530
          %v1532 = vld [vmem:[%s6] sm:$0x1]
          %v1533 = vmul.f32 %v1504, %v1530
          %v1534 = vsub.f32 %v1532, %v1533
          %1535 = vst [vmem:[%s8 + $0x1] sm:$0x1] %v1534
        $region72: #{residual_block_encoder.2} parent=63 // pred_fallthru
          _
      $region64: #{residual_block_encoder.2} parent=47 // pred_fallthru
        _
      // Predicated region
      $region73: #{residual_block_encoder.2} parent=47 // pred_check
        %p1536 = pneg %p197
      $region74: #{residual_block_encoder.2} parent=47 // pred_check_branch
        %1538 = sbr.rel (%p1536) target = $region76
      $region75: #{residual_block_encoder.2} parent=47 // pred_region
        _
      $region76: #{residual_block_encoder.2} parent=47 // pred_fallthru
        _
      // Predicated region
      $region77: #{residual_block_encoder.2} parent=47 // pred_check
        %p1539 = pneg %p218
      $region78: #{residual_block_encoder.2} parent=47 // pred_check_branch
        %1541 = sbr.rel (%p1539) target = $region80
      $region79: #{residual_block_encoder.2} parent=47 // pred_region
        _
      $region80: #{residual_block_encoder.2} parent=47 // pred_fallthru
        _
      // Predicated region
      $region81: #{residual_block_encoder.2} parent=47 // pred_check
        %p1542 = pneg %p197
      $region82: #{residual_block_encoder.2} parent=47 // pred_check_branch
        %1544 = sbr.rel (%p1542) target = $region84
      $region83: #{residual_block_encoder.2} parent=47 // pred_region
        _
      $region84: #{residual_block_encoder.2} parent=47 // pred_fallthru
        _
      // Predicated region
      $region85: #{residual_block_encoder.2} parent=47 // pred_check
        %p1545 = pneg %p218
      $region86: #{residual_block_encoder.2} parent=47 // pred_check_branch
        %1547 = sbr.rel (%p1545) target = $region88
      $region87: #{residual_block_encoder.2} parent=47 // pred_region
        _
      $region88: #{residual_block_encoder.2} parent=47 // pred_fallthru
        _
    $region48: #{residual_block_encoder.2} parent=5 // pred_fallthru
      _
    %p1548 = scmp.le.s32.totalorder 2, %s15
    // Predicated region
    $region89: #{residual_block_encoder.2} parent=5 // pred_check
      %p1549 = pneg %p1548
    $region90: #{residual_block_encoder.2} parent=5 // pred_check_branch
      %1551 = sbr.rel (%p1549) target = $region92
    $region91: #{residual_block_encoder.2} parent=5 // pred_region
      %s1552 = ssub.s32 %s15, 2
    $region92: #{residual_block_encoder.2} parent=5 // pred_fallthru
      _
  $region6: #{residual_block_encoder.2} parent=0 // loop_footer
    %s19 = sadd.s32 1, %s15
  $region7: #{residual_block_encoder.2} parent=0 // loop_footer_branch
    %14 = sbr.rel target = $region3
  $region8: #{residual_block_encoder.2} parent=0 // loop_exit
    _

// kernel: residual_block_encoder.3
$region0: #{residual_block_encoder.3}
  #allocation0 [shape = 'u32[]', space=smem, size = 0x4, offset = 0x4, fixed_abs, tag = 'smem constant byte address 0x4 - core index']
  #allocation1 [shape = 'u32[144,128]{1,0:T(1,128)}', space=vmem, size = 0x12000, scoped, tag = 'internal scratch']
  #allocation2 [shape = 'bf16[2,10,128]{2,1,0:T(8,128)(2,1)}', space=vmem, size = 0x2000, scoped, tag = 'scratch operand']
  %s0 = inlined_call_operand.vmem [shape: bf16[2,10,128], index: 0, kind: input, shape index: {}]
  %s1 = inlined_call_operand.vmem [shape: f32[16,128], index: 1, kind: input, shape index: {}]
  %s2 = inlined_call_operand.vmem [shape: bf16[384,128], index: 2, kind: input, shape index: {}]
  %s3 = inlined_call_operand.vmem [shape: bf16[384,128], index: 3, kind: input, shape index: {}]
  %s4 = inlined_call_operand.vmem [shape: f32[2,128], index: 4, kind: input, shape index: {}]
  %s5 = inlined_call_operand.vmem [shape: f32[2,128], index: 5, kind: input, shape index: {}]
  %s6 = inlined_call_operand.vmem [shape: f32[16,128], index: 6, kind: output, shape index: {}]
  %s7 = sld [smem:[#allocation0]]
  $region34: #{residual_block_encoder.3} parent=0
    _
  %s9 = ssub.s32 1, %s7
  %s10 = scalar_select 0, %s9, %s7
  // Predicated region
  $region2: #{residual_block_encoder.3} parent=0 // pred_check
    _
  $region3: #{residual_block_encoder.3} parent=0 // pred_check_branch
    %12 = sbr.rel (0) target = $region5
  $region4: #{residual_block_encoder.3} parent=0 // pred_region
    _
  $region5: #{residual_block_encoder.3} parent=0 // pred_fallthru
    _
  // Predicated region
  $region6: #{residual_block_encoder.3} parent=0 // pred_check
    _
  $region7: #{residual_block_encoder.3} parent=0 // pred_check_branch
    %14 = sbr.rel (0) target = $region9
  $region8: #{residual_block_encoder.3} parent=0 // pred_region
    _
  $region9: #{residual_block_encoder.3} parent=0 // pred_fallthru
    _
  // Predicated region
  $region10: #{residual_block_encoder.3} parent=0 // pred_check
    _
  $region11: #{residual_block_encoder.3} parent=0 // pred_check_branch
    %16 = sbr.rel (0) target = $region13
  $region12: #{residual_block_encoder.3} parent=0 // pred_region
    _
  $region13: #{residual_block_encoder.3} parent=0 // pred_fallthru
    _
  // Predicated region
  $region14: #{residual_block_encoder.3} parent=0 // pred_check
    _
  $region15: #{residual_block_encoder.3} parent=0 // pred_check_branch
    %18 = sbr.rel (0) target = $region17
  $region16: #{residual_block_encoder.3} parent=0 // pred_region
    _
  $region17: #{residual_block_encoder.3} parent=0 // pred_fallthru
    _
  // Predicated region
  $region18: #{residual_block_encoder.3} parent=0 // pred_check
    _
  $region19: #{residual_block_encoder.3} parent=0 // pred_check_branch
    %20 = sbr.rel (0) target = $region21
  $region20: #{residual_block_encoder.3} parent=0 // pred_region
    _
  $region21: #{residual_block_encoder.3} parent=0 // pred_fallthru
    _
  // Predicated region
  $region22: #{residual_block_encoder.3} parent=0 // pred_check
    _
  $region23: #{residual_block_encoder.3} parent=0 // pred_check_branch
    %22 = sbr.rel (0) target = $region25
  $region24: #{residual_block_encoder.3} parent=0 // pred_region
    _
  $region25: #{residual_block_encoder.3} parent=0 // pred_fallthru
    _
  %v24 = vld [vmem:[%s0] sm:$0xf]
  %v25 = vld [vmem:[%s0 + $0x4] sm:$0x1]
  %v26 = vld [vmem:[%s0] sm:$0xe]
  %v29 = vunpack.c.l.b16 %v24
  %v30 = vunpack.c.l.b16 %v25
  %v31 = vpack.c.b16 %v30, %v29
  %v33 = vshrl.u32 %v31, 16
  %v35 = vshll.u32 %v31, 16
  %v37 = vrot.slane %v35, 1
  %v38 = vor.u32 %v33, %v37
  %v40 = vunpack.c.l.b16 %v26
  %v41 = vpack.c.b16 %v30, %v40
  %v42 = vrot.slane %v41, 1
  %s43 = scalar_lea.vmem %s0, 8
  %v44 = vld [vmem:[%s43] sm:$0xf]
  %v45 = vld [vmem:[%s43 + $0x4] sm:$0x1]
  %v46 = vld [vmem:[%s43] sm:$0xe]
  %v49 = vunpack.c.l.b16 %v44
  %v50 = vunpack.c.l.b16 %v45
  %v51 = vpack.c.b16 %v50, %v49
  %v53 = vshrl.u32 %v51, 16
  %v55 = vshll.u32 %v51, 16
  %v57 = vrot.slane %v55, 1
  %v58 = vor.u32 %v53, %v57
  %v60 = vunpack.c.l.b16 %v46
  %v61 = vpack.c.b16 %v50, %v60
  %v62 = vrot.slane %v61, 1
  %v63 = vrot.slane %v44, 4
  %v64 = vrot.slane %v58, 4
  %v65 = vrot.slane %v62, 4
  %vm66 = vcmask 1043456
  %v69 = vsel %vm66, %v24, %v63
  %v73 = vsel %vm66, %v38, %v64
  %v77 = vsel %vm66, %v42, %v65
  %v79 = vld [vmem:[%s2] sm:$0xf]
  %v80 = vld [vmem:[%s2 + $0x4] sm:$0xf]
  %v81 = vld [vmem:[%s2 + $0x8] sm:$0xf]
  %v82 = vld [vmem:[%s2 + $0xc] sm:$0xf]
  %v83 = vld [vmem:[%s2 + $0x10] sm:$0xf]
  %v84 = vld [vmem:[%s2 + $0x14] sm:$0xf]
  %v85 = vld [vmem:[%s2 + $0x18] sm:$0xf]
  %v86 = vld [vmem:[%s2 + $0x1c] sm:$0xf]
  %v87 = vld [vmem:[%s2 + $0x20] sm:$0xf]
  %v88 = vld [vmem:[%s2 + $0x24] sm:$0xf]
  %v89 = vld [vmem:[%s2 + $0x28] sm:$0xf]
  %v90 = vld [vmem:[%s2 + $0x2c] sm:$0xf]
  %v91 = vld [vmem:[%s2 + $0x30] sm:$0xf]
  %v92 = vld [vmem:[%s2 + $0x34] sm:$0xf]
  %v93 = vld [vmem:[%s2 + $0x38] sm:$0xf]
  %v94 = vld [vmem:[%s2 + $0x3c] sm:$0xf]
  %v95 = vld [vmem:[%s2 + $0x40] sm:$0xf]
  %v96 = vld [vmem:[%s2 + $0x44] sm:$0xf]
  %v97 = vld [vmem:[%s2 + $0x48] sm:$0xf]
  %v98 = vld [vmem:[%s2 + $0x4c] sm:$0xf]
  %v99 = vld [vmem:[%s2 + $0x50] sm:$0xf]
  %v100 = vld [vmem:[%s2 + $0x54] sm:$0xf]
  %v101 = vld [vmem:[%s2 + $0x58] sm:$0xf]
  %v102 = vld [vmem:[%s2 + $0x5c] sm:$0xf]
  %v103 = vld [vmem:[%s2 + $0x60] sm:$0xf]
  %v104 = vld [vmem:[%s2 + $0x64] sm:$0xf]
  %v105 = vld [vmem:[%s2 + $0x68] sm:$0xf]
  %v106 = vld [vmem:[%s2 + $0x6c] sm:$0xf]
  %v107 = vld [vmem:[%s2 + $0x70] sm:$0xf]
  %v108 = vld [vmem:[%s2 + $0x74] sm:$0xf]
  %v109 = vld [vmem:[%s2 + $0x78] sm:$0xf]
  %v110 = vld [vmem:[%s2 + $0x7c] sm:$0xf]
  %v111 = vld [vmem:[%s2 + $0x80] sm:$0xf]
  %v112 = vld [vmem:[%s2 + $0x84] sm:$0xf]
  %v113 = vld [vmem:[%s2 + $0x88] sm:$0xf]
  %v114 = vld [vmem:[%s2 + $0x8c] sm:$0xf]
  %v115 = vld [vmem:[%s2 + $0x90] sm:$0xf]
  %v116 = vld [vmem:[%s2 + $0x94] sm:$0xf]
  %v117 = vld [vmem:[%s2 + $0x98] sm:$0xf]
  %v118 = vld [vmem:[%s2 + $0x9c] sm:$0xf]
  %v119 = vld [vmem:[%s2 + $0xa0] sm:$0xf]
  %v120 = vld [vmem:[%s2 + $0xa4] sm:$0xf]
  %v121 = vld [vmem:[%s2 + $0xa8] sm:$0xf]
  %v122 = vld [vmem:[%s2 + $0xac] sm:$0xf]
  %v123 = vld [vmem:[%s2 + $0xb0] sm:$0xf]
  %v124 = vld [vmem:[%s2 + $0xb4] sm:$0xf]
  %v125 = vld [vmem:[%s2 + $0xb8] sm:$0xf]
  %v126 = vld [vmem:[%s2 + $0xbc] sm:$0xf]
  %v175 = vunpack.c.l.b16 %v79
  %v176 = vunpack.c.l.b16 %v80
  %v177 = vunpack.c.l.b16 %v81
  %v178 = vunpack.c.l.b16 %v82
  %v179 = vunpack.c.l.b16 %v83
  %v180 = vunpack.c.l.b16 %v84
  %v181 = vunpack.c.l.b16 %v85
  %v182 = vunpack.c.l.b16 %v86
  %v183 = vunpack.c.l.b16 %v87
  %v184 = vunpack.c.l.b16 %v88
  %v185 = vunpack.c.l.b16 %v89
  %v186 = vunpack.c.l.b16 %v90
  %v187 = vunpack.c.l.b16 %v91
  %v188 = vunpack.c.l.b16 %v92
  %v189 = vunpack.c.l.b16 %v93
  %v190 = vunpack.c.l.b16 %v94
  %v191 = vunpack.c.l.b16 %v95
  %v192 = vunpack.c.l.b16 %v96
  %v193 = vunpack.c.l.b16 %v97
  %v194 = vunpack.c.l.b16 %v98
  %v195 = vunpack.c.l.b16 %v99
  %v196 = vunpack.c.l.b16 %v100
  %v197 = vunpack.c.l.b16 %v101
  %v198 = vunpack.c.l.b16 %v102
  %v199 = vunpack.c.l.b16 %v103
  %v200 = vunpack.c.l.b16 %v104
  %v201 = vunpack.c.l.b16 %v105
  %v202 = vunpack.c.l.b16 %v106
  %v203 = vunpack.c.l.b16 %v107
  %v204 = vunpack.c.l.b16 %v108
  %v205 = vunpack.c.l.b16 %v109
  %v206 = vunpack.c.l.b16 %v110
  %v207 = vunpack.c.l.b16 %v111
  %v208 = vunpack.c.l.b16 %v112
  %v209 = vunpack.c.l.b16 %v113
  %v210 = vunpack.c.l.b16 %v114
  %v211 = vunpack.c.l.b16 %v115
  %v212 = vunpack.c.l.b16 %v116
  %v213 = vunpack.c.l.b16 %v117
  %v214 = vunpack.c.l.b16 %v118
  %v215 = vunpack.c.l.b16 %v119
  %v216 = vunpack.c.l.b16 %v120
  %v217 = vunpack.c.l.b16 %v121
  %v218 = vunpack.c.l.b16 %v122
  %v219 = vunpack.c.l.b16 %v123
  %v220 = vunpack.c.l.b16 %v124
  %v221 = vunpack.c.l.b16 %v125
  %v222 = vunpack.c.l.b16 %v126
  %v223 = vpack.c.b16 %v176, %v175
  %v224 = vpack.c.b16 %v178, %v177
  %v225 = vpack.c.b16 %v180, %v179
  %v226 = vpack.c.b16 %v182, %v181
  %v227 = vpack.c.b16 %v184, %v183
  %v228 = vpack.c.b16 %v186, %v185
  %v229 = vpack.c.b16 %v188, %v187
  %v230 = vpack.c.b16 %v190, %v189
  %v231 = vpack.c.b16 %v192, %v191
  %v232 = vpack.c.b16 %v194, %v193
  %v233 = vpack.c.b16 %v196, %v195
  %v234 = vpack.c.b16 %v198, %v197
  %v235 = vpack.c.b16 %v200, %v199
  %v236 = vpack.c.b16 %v202, %v201
  %v237 = vpack.c.b16 %v204, %v203
  %v238 = vpack.c.b16 %v206, %v205
  %v239 = vpack.c.b16 %v208, %v207
  %v240 = vpack.c.b16 %v210, %v209
  %v241 = vpack.c.b16 %v212, %v211
  %v242 = vpack.c.b16 %v214, %v213
  %v243 = vpack.c.b16 %v216, %v215
  %v244 = vpack.c.b16 %v218, %v217
  %v245 = vpack.c.b16 %v220, %v219
  %v246 = vpack.c.b16 %v222, %v221
  %271 = vmatprep.subr.bf16.mxu0 0
  %272 = vmatpush1.bf16.msra.mxu0 %v223
  %273 = vmatprep.subr.bf16.mxu0 0
  %274 = vmatpush1.bf16.msra.mxu0 %v224
  %275 = vmatprep.subr.bf16.mxu0 0
  %276 = vmatpush1.bf16.msra.mxu0 %v225
  %277 = vmatprep.subr.bf16.mxu0 0
  %278 = vmatpush1.bf16.msra.mxu0 %v226
  %279 = vmatprep.subr.bf16.mxu0 0
  %280 = vmatpush1.bf16.msra.mxu0 %v227
  %281 = vmatprep.subr.bf16.mxu0 0
  %282 = vmatpush1.bf16.msra.mxu0 %v228
  %283 = vmatprep.subr.bf16.mxu0 0
  %284 = vmatpush1.bf16.msra.mxu0 %v229
  %285 = vmatprep.subr.bf16.mxu0 0
  %286 = vmatpush1.bf16.msra.mxu0 %v230
  %287 = vmatprep.subr.bf16.mxu0 0
  %288 = vmatpush1.bf16.msra.mxu0 %v231
  %289 = vmatprep.subr.bf16.mxu0 0
  %290 = vmatpush1.bf16.msra.mxu0 %v232
  %291 = vmatprep.subr.bf16.mxu0 0
  %292 = vmatpush1.bf16.msra.mxu0 %v233
  %293 = vmatprep.subr.bf16.mxu0 0
  %294 = vmatpush1.bf16.msra.mxu0 %v234
  %295 = vmatprep.subr.bf16.mxu0 0
  %296 = vmatpush1.bf16.msra.mxu0 %v235
  %297 = vmatprep.subr.bf16.mxu0 0
  %298 = vmatpush1.bf16.msra.mxu0 %v236
  %299 = vmatprep.subr.bf16.mxu0 0
  %300 = vmatpush1.bf16.msra.mxu0 %v237
  %301 = vmatprep.subr.bf16.mxu0 0
  %302 = vmatpush1.bf16.msra.mxu0 %v238
  %303 = vmatprep.mubr.bf16.mxu0 %v73
  %304 = vmatmul.mubr.bf16.gmra.mrb[0].mxu0 %v69
  %v305 = vpop.f32.mrb[0].mxu0
  %v306 = vadd.f32 0.0, %v305
  %v307 = vpop.f32.mrb[0].mxu0
  %v308 = vpop.f32.mrb[0].mxu0
  %v309 = vadd.f32 0.0, %v308
  %v310 = vpop.f32.mrb[0].mxu0
  %311 = vdwg.mxu0
  %312 = vmatprep.subr.bf16.mxu0 0
  %313 = vmatpush1.bf16.msra.mxu0 %v239
  %314 = vmatprep.subr.bf16.mxu0 0
  %315 = vmatpush1.bf16.msra.mxu0 %v240
  %316 = vmatprep.subr.bf16.mxu0 0
  %317 = vmatpush1.bf16.msra.mxu0 %v241
  %318 = vmatprep.subr.bf16.mxu0 0
  %319 = vmatpush1.bf16.msra.mxu0 %v242
  %320 = vmatprep.subr.bf16.mxu0 0
  %321 = vmatpush1.bf16.msra.mxu0 %v243
  %322 = vmatprep.subr.bf16.mxu0 0
  %323 = vmatpush1.bf16.msra.mxu0 %v244
  %324 = vmatprep.subr.bf16.mxu0 0
  %325 = vmatpush1.bf16.msra.mxu0 %v245
  %326 = vmatprep.subr.bf16.mxu0 0
  %327 = vmatpush1.bf16.msra.mxu0 %v246
  %328 = vmatprep.subr.bf16.mxu0 0
  %329 = vmatpush1.bf16.msra.mxu0 0
  %330 = vmatprep.subr.bf16.mxu0 0
  %331 = vmatpush1.bf16.msra.mxu0 0
  %332 = vmatprep.subr.bf16.mxu0 0
  %333 = vmatpush1.bf16.msra.mxu0 0
  %334 = vmatprep.subr.bf16.mxu0 0
  %335 = vmatpush1.bf16.msra.mxu0 0
  %336 = vmatprep.subr.bf16.mxu0 0
  %337 = vmatpush1.bf16.msra.mxu0 0
  %338 = vmatprep.subr.bf16.mxu0 0
  %339 = vmatpush1.bf16.msra.mxu0 0
  %340 = vmatprep.subr.bf16.mxu0 0
  %341 = vmatpush1.bf16.msra.mxu0 0
  %342 = vmatprep.subr.bf16.mxu0 0
  %343 = vmatpush1.bf16.msra.mxu0 0
  %344 = vmatprep.mubr.bf16.mxu0 0
  %345 = vmatmul.mubr.bf16.gmra.mrb[0].mxu0 %v77
  %v346 = vpop.f32.mrb[0].mxu0
  %v347 = vadd.f32 %v306, %v346
  %v348 = vpop.f32.mrb[0].mxu0
  %v349 = vpop.f32.mrb[0].mxu0
  %v350 = vadd.f32 %v309, %v349
  %v351 = vpop.f32.mrb[0].mxu0
  %352 = vdwg.mxu0
  %v353 = vld [vmem:[%s4] sm:$0x1]
  %v354 = vlaneseq
  %v355 = vshrl.u32 %v354, 7
  %v356 = vsub.s32 0, %v355
  %v357 = vrot.slane %v353, %v356
  %v358 = vmul.f32 %v347, %v357
  %v359 = vmul.f32 %v350, %v357
  %v360 = vld [vmem:[%s4 + $0x1] sm:$0x1]
  %v361 = vlaneseq
  %v362 = vshrl.u32 %v361, 7
  %v363 = vsub.s32 0, %v362
  %v364 = vrot.slane %v360, %v363
  %v365 = vadd.f32 %v358, %v364
  %v366 = vadd.f32 %v359, %v364
  %vm367 = vcmp.ge.f32.partialorder %v365, 0.0
  %vm368 = vcmp.ge.f32.partialorder %v366, 0.0
  %v369 = vmul.f32 %v365, 0.2
  %v370 = vmul.f32 %v366, 0.2
  %v371 = vsel %vm367, %v365, %v369
  %v372 = vsel %vm368, %v366, %v370
  %vm373 = vcmask 1040384
  %vm374 = vsmask.f32 256
  %vm375 = vmand %vm373, %vm374
  %v376 = vld [vmem:[#allocation2] sm:$0x1]
  %v377 = vsel %vm375, 0, %v376
  %378 = vst [vmem:[#allocation2] sm:$0x1] %v377
  %v379 = vld [vmem:[#allocation2 + $0x8] sm:$0x1]
  %v380 = vsel %vm375, 0, %v379
  %381 = vst [vmem:[#allocation2 + $0x8] sm:$0x1] %v380
  %vm382 = vsmask.f32 7938
  %vm383 = vmand %vm373, %vm382
  %v384 = vld [vmem:[#allocation2 + $0x4] sm:$0x1]
  %v385 = vsel %vm383, 0, %v384
  %386 = vst [vmem:[#allocation2 + $0x4] sm:$0x1] %v385
  %v387 = vld [vmem:[#allocation2 + $0xc] sm:$0x1]
  %v388 = vsel %vm383, 0, %v387
  %389 = vst [vmem:[#allocation2 + $0xc] sm:$0x1] %v388
  %v390 = vpack.c.bf16 %v372, %v371
  %v392 = vunpack.c.l.b16 %v390
  %v393 = vunpack.c.h.b16 %v390
  %v394 = vpack.c.b16 %v392, %v392
  %v395 = vpack.c.b16 %v393, %v393
  %v397 = vshrl.u32 %v394, 16
  %v399 = vrot.slane %v397, 7
  %v400 = vshll.u32 %v394, 16
  %v402 = vor.u32 %v399, %v400
  %v403 = vrot.slane %v399, 4
  %v405 = vshrl.u32 %v395, 16
  %v407 = vrot.slane %v405, 7
  %v408 = vshll.u32 %v395, 16
  %v410 = vor.u32 %v407, %v408
  %v411 = vrot.slane %v407, 4
  %vm416 = vcmask 1043456
  %vm417 = vmand %vm416, %vm382
  %v418 = vld [vmem:[#allocation2] sm:$0xf]
  %v419 = vsel %vm417, %v402, %v418
  %420 = vst [vmem:[#allocation2] sm:$0xf] %v419
  %v421 = vld [vmem:[#allocation2 + $0x4] sm:$0x1]
  %v422 = vsel %vm375, %v403, %v421
  %423 = vst [vmem:[#allocation2 + $0x4] sm:$0x1] %v422
  %v424 = vld [vmem:[#allocation2 + $0x8] sm:$0xf]
  %v425 = vsel %vm417, %v410, %v424
  %426 = vst [vmem:[#allocation2 + $0x8] sm:$0xf] %v425
  %v427 = vld [vmem:[#allocation2 + $0xc] sm:$0x1]
  %v428 = vsel %vm375, %v411, %v427
  %429 = vst [vmem:[#allocation2 + $0xc] sm:$0x1] %v428
  %v430 = vld [vmem:[#allocation2] sm:$0xf]
  %v431 = vld [vmem:[#allocation2 + $0x4] sm:$0x1]
  %v432 = vld [vmem:[#allocation2] sm:$0xe]
  %v435 = vunpack.c.l.b16 %v430
  %v436 = vunpack.c.l.b16 %v431
  %v437 = vpack.c.b16 %v436, %v435
  %v439 = vshrl.u32 %v437, 16
  %v441 = vshll.u32 %v437, 16
  %v443 = vrot.slane %v441, 1
  %v444 = vor.u32 %v439, %v443
  %v446 = vunpack.c.l.b16 %v432
  %v447 = vpack.c.b16 %v436, %v446
  %v448 = vrot.slane %v447, 1
  %s449 = scalar_lea.vmem [#allocation2], 8
  %v450 = vld [vmem:[%s449] sm:$0xf]
  %v451 = vld [vmem:[%s449 + $0x4] sm:$0x1]
  %v452 = vld [vmem:[%s449] sm:$0xe]
  %v455 = vunpack.c.l.b16 %v450
  %v456 = vunpack.c.l.b16 %v451
  %v457 = vpack.c.b16 %v456, %v455
  %v459 = vshrl.u32 %v457, 16
  %v461 = vshll.u32 %v457, 16
  %v463 = vrot.slane %v461, 1
  %v464 = vor.u32 %v459, %v463
  %v466 = vunpack.c.l.b16 %v452
  %v467 = vpack.c.b16 %v456, %v466
  %v468 = vrot.slane %v467, 1
  %v469 = vrot.slane %v450, 4
  %v470 = vrot.slane %v464, 4
  %v471 = vrot.slane %v468, 4
  %v474 = vsel %vm66, %v430, %v469
  %v478 = vsel %vm66, %v444, %v470
  %v482 = vsel %vm66, %v448, %v471
  %v484 = vld [vmem:[%s3] sm:$0xf]
  %v485 = vld [vmem:[%s3 + $0x4] sm:$0xf]
  %v486 = vld [vmem:[%s3 + $0x8] sm:$0xf]
  %v487 = vld [vmem:[%s3 + $0xc] sm:$0xf]
  %v488 = vld [vmem:[%s3 + $0x10] sm:$0xf]
  %v489 = vld [vmem:[%s3 + $0x14] sm:$0xf]
  %v490 = vld [vmem:[%s3 + $0x18] sm:$0xf]
  %v491 = vld [vmem:[%s3 + $0x1c] sm:$0xf]
  %v492 = vld [vmem:[%s3 + $0x20] sm:$0xf]
  %v493 = vld [vmem:[%s3 + $0x24] sm:$0xf]
  %v494 = vld [vmem:[%s3 + $0x28] sm:$0xf]
  %v495 = vld [vmem:[%s3 + $0x2c] sm:$0xf]
  %v496 = vld [vmem:[%s3 + $0x30] sm:$0xf]
  %v497 = vld [vmem:[%s3 + $0x34] sm:$0xf]
  %v498 = vld [vmem:[%s3 + $0x38] sm:$0xf]
  %v499 = vld [vmem:[%s3 + $0x3c] sm:$0xf]
  %v500 = vld [vmem:[%s3 + $0x40] sm:$0xf]
  %v501 = vld [vmem:[%s3 + $0x44] sm:$0xf]
  %v502 = vld [vmem:[%s3 + $0x48] sm:$0xf]
  %v503 = vld [vmem:[%s3 + $0x4c] sm:$0xf]
  %v504 = vld [vmem:[%s3 + $0x50] sm:$0xf]
  %v505 = vld [vmem:[%s3 + $0x54] sm:$0xf]
  %v506 = vld [vmem:[%s3 + $0x58] sm:$0xf]
  %v507 = vld [vmem:[%s3 + $0x5c] sm:$0xf]
  %v508 = vld [vmem:[%s3 + $0x60] sm:$0xf]
  %v509 = vld [vmem:[%s3 + $0x64] sm:$0xf]
  %v510 = vld [vmem:[%s3 + $0x68] sm:$0xf]
  %v511 = vld [vmem:[%s3 + $0x6c] sm:$0xf]
  %v512 = vld [vmem:[%s3 + $0x70] sm:$0xf]
  %v513 = vld [vmem:[%s3 + $0x74] sm:$0xf]
  %v514 = vld [vmem:[%s3 + $0x78] sm:$0xf]
  %v515 = vld [vmem:[%s3 + $0x7c] sm:$0xf]
  %v516 = vld [vmem:[%s3 + $0x80] sm:$0xf]
  %v517 = vld [vmem:[%s3 + $0x84] sm:$0xf]
  %v518 = vld [vmem:[%s3 + $0x88] sm:$0xf]
  %v519 = vld [vmem:[%s3 + $0x8c] sm:$0xf]
  %v520 = vld [vmem:[%s3 + $0x90] sm:$0xf]
  %v521 = vld [vmem:[%s3 + $0x94] sm:$0xf]
  %v522 = vld [vmem:[%s3 + $0x98] sm:$0xf]
  %v523 = vld [vmem:[%s3 + $0x9c] sm:$0xf]
  %v524 = vld [vmem:[%s3 + $0xa0] sm:$0xf]
  %v525 = vld [vmem:[%s3 + $0xa4] sm:$0xf]
  %v526 = vld [vmem:[%s3 + $0xa8] sm:$0xf]
  %v527 = vld [vmem:[%s3 + $0xac] sm:$0xf]
  %v528 = vld [vmem:[%s3 + $0xb0] sm:$0xf]
  %v529 = vld [vmem:[%s3 + $0xb4] sm:$0xf]
  %v530 = vld [vmem:[%s3 + $0xb8] sm:$0xf]
  %v531 = vld [vmem:[%s3 + $0xbc] sm:$0xf]
  %v580 = vunpack.c.l.b16 %v484
  %v581 = vunpack.c.l.b16 %v485
  %v582 = vunpack.c.l.b16 %v486
  %v583 = vunpack.c.l.b16 %v487
  %v584 = vunpack.c.l.b16 %v488
  %v585 = vunpack.c.l.b16 %v489
  %v586 = vunpack.c.l.b16 %v490
  %v587 = vunpack.c.l.b16 %v491
  %v588 = vunpack.c.l.b16 %v492
  %v589 = vunpack.c.l.b16 %v493
  %v590 = vunpack.c.l.b16 %v494
  %v591 = vunpack.c.l.b16 %v495
  %v592 = vunpack.c.l.b16 %v496
  %v593 = vunpack.c.l.b16 %v497
  %v594 = vunpack.c.l.b16 %v498
  %v595 = vunpack.c.l.b16 %v499
  %v596 = vunpack.c.l.b16 %v500
  %v597 = vunpack.c.l.b16 %v501
  %v598 = vunpack.c.l.b16 %v502
  %v599 = vunpack.c.l.b16 %v503
  %v600 = vunpack.c.l.b16 %v504
  %v601 = vunpack.c.l.b16 %v505
  %v602 = vunpack.c.l.b16 %v506
  %v603 = vunpack.c.l.b16 %v507
  %v604 = vunpack.c.l.b16 %v508
  %v605 = vunpack.c.l.b16 %v509
  %v606 = vunpack.c.l.b16 %v510
  %v607 = vunpack.c.l.b16 %v511
  %v608 = vunpack.c.l.b16 %v512
  %v609 = vunpack.c.l.b16 %v513
  %v610 = vunpack.c.l.b16 %v514
  %v611 = vunpack.c.l.b16 %v515
  %v612 = vunpack.c.l.b16 %v516
  %v613 = vunpack.c.l.b16 %v517
  %v614 = vunpack.c.l.b16 %v518
  %v615 = vunpack.c.l.b16 %v519
  %v616 = vunpack.c.l.b16 %v520
  %v617 = vunpack.c.l.b16 %v521
  %v618 = vunpack.c.l.b16 %v522
  %v619 = vunpack.c.l.b16 %v523
  %v620 = vunpack.c.l.b16 %v524
  %v621 = vunpack.c.l.b16 %v525
  %v622 = vunpack.c.l.b16 %v526
  %v623 = vunpack.c.l.b16 %v527
  %v624 = vunpack.c.l.b16 %v528
  %v625 = vunpack.c.l.b16 %v529
  %v626 = vunpack.c.l.b16 %v530
  %v627 = vunpack.c.l.b16 %v531
  %v628 = vpack.c.b16 %v581, %v580
  %v629 = vpack.c.b16 %v583, %v582
  %v630 = vpack.c.b16 %v585, %v584
  %v631 = vpack.c.b16 %v587, %v586
  %v632 = vpack.c.b16 %v589, %v588
  %v633 = vpack.c.b16 %v591, %v590
  %v634 = vpack.c.b16 %v593, %v592
  %v635 = vpack.c.b16 %v595, %v594
  %v636 = vpack.c.b16 %v597, %v596
  %v637 = vpack.c.b16 %v599, %v598
  %v638 = vpack.c.b16 %v601, %v600
  %v639 = vpack.c.b16 %v603, %v602
  %v640 = vpack.c.b16 %v605, %v604
  %v641 = vpack.c.b16 %v607, %v606
  %v642 = vpack.c.b16 %v609, %v608
  %v643 = vpack.c.b16 %v611, %v610
  %v644 = vpack.c.b16 %v613, %v612
  %v645 = vpack.c.b16 %v615, %v614
  %v646 = vpack.c.b16 %v617, %v616
  %v647 = vpack.c.b16 %v619, %v618
  %v648 = vpack.c.b16 %v621, %v620
  %v649 = vpack.c.b16 %v623, %v622
  %v650 = vpack.c.b16 %v625, %v624
  %v651 = vpack.c.b16 %v627, %v626
  %676 = vmatprep.subr.bf16.mxu0 0
  %677 = vmatpush1.bf16.msra.mxu0 %v628
  %678 = vmatprep.subr.bf16.mxu0 0
  %679 = vmatpush1.bf16.msra.mxu0 %v629
  %680 = vmatprep.subr.bf16.mxu0 0
  %681 = vmatpush1.bf16.msra.mxu0 %v630
  %682 = vmatprep.subr.bf16.mxu0 0
  %683 = vmatpush1.bf16.msra.mxu0 %v631
  %684 = vmatprep.subr.bf16.mxu0 0
  %685 = vmatpush1.bf16.msra.mxu0 %v632
  %686 = vmatprep.subr.bf16.mxu0 0
  %687 = vmatpush1.bf16.msra.mxu0 %v633
  %688 = vmatprep.subr.bf16.mxu0 0
  %689 = vmatpush1.bf16.msra.mxu0 %v634
  %690 = vmatprep.subr.bf16.mxu0 0
  %691 = vmatpush1.bf16.msra.mxu0 %v635
  %692 = vmatprep.subr.bf16.mxu0 0
  %693 = vmatpush1.bf16.msra.mxu0 %v636
  %694 = vmatprep.subr.bf16.mxu0 0
  %695 = vmatpush1.bf16.msra.mxu0 %v637
  %696 = vmatprep.subr.bf16.mxu0 0
  %697 = vmatpush1.bf16.msra.mxu0 %v638
  %698 = vmatprep.subr.bf16.mxu0 0
  %699 = vmatpush1.bf16.msra.mxu0 %v639
  %700 = vmatprep.subr.bf16.mxu0 0
  %701 = vmatpush1.bf16.msra.mxu0 %v640
  %702 = vmatprep.subr.bf16.mxu0 0
  %703 = vmatpush1.bf16.msra.mxu0 %v641
  %704 = vmatprep.subr.bf16.mxu0 0
  %705 = vmatpush1.bf16.msra.mxu0 %v642
  %706 = vmatprep.subr.bf16.mxu0 0
  %707 = vmatpush1.bf16.msra.mxu0 %v643
  %708 = vmatprep.mubr.bf16.mxu0 %v478
  %709 = vmatmul.mubr.bf16.gmra.mrb[0].mxu0 %v474
  %v710 = vpop.f32.mrb[0].mxu0
  %v711 = vadd.f32 0.0, %v710
  %v712 = vpop.f32.mrb[0].mxu0
  %v713 = vpop.f32.mrb[0].mxu0
  %v714 = vadd.f32 0.0, %v713
  %v715 = vpop.f32.mrb[0].mxu0
  %716 = vdwg.mxu0
  %717 = vmatprep.subr.bf16.mxu0 0
  %718 = vmatpush1.bf16.msra.mxu0 %v644
  %719 = vmatprep.subr.bf16.mxu0 0
  %720 = vmatpush1.bf16.msra.mxu0 %v645
  %721 = vmatprep.subr.bf16.mxu0 0
  %722 = vmatpush1.bf16.msra.mxu0 %v646
  %723 = vmatprep.subr.bf16.mxu0 0
  %724 = vmatpush1.bf16.msra.mxu0 %v647
  %725 = vmatprep.subr.bf16.mxu0 0
  %726 = vmatpush1.bf16.msra.mxu0 %v648
  %727 = vmatprep.subr.bf16.mxu0 0
  %728 = vmatpush1.bf16.msra.mxu0 %v649
  %729 = vmatprep.subr.bf16.mxu0 0
  %730 = vmatpush1.bf16.msra.mxu0 %v650
  %731 = vmatprep.subr.bf16.mxu0 0
  %732 = vmatpush1.bf16.msra.mxu0 %v651
  %733 = vmatprep.subr.bf16.mxu0 0
  %734 = vmatpush1.bf16.msra.mxu0 0
  %735 = vmatprep.subr.bf16.mxu0 0
  %736 = vmatpush1.bf16.msra.mxu0 0
  %737 = vmatprep.subr.bf16.mxu0 0
  %738 = vmatpush1.bf16.msra.mxu0 0
  %739 = vmatprep.subr.bf16.mxu0 0
  %740 = vmatpush1.bf16.msra.mxu0 0
  %741 = vmatprep.subr.bf16.mxu0 0
  %742 = vmatpush1.bf16.msra.mxu0 0
  %743 = vmatprep.subr.bf16.mxu0 0
  %744 = vmatpush1.bf16.msra.mxu0 0
  %745 = vmatprep.subr.bf16.mxu0 0
  %746 = vmatpush1.bf16.msra.mxu0 0
  %747 = vmatprep.subr.bf16.mxu0 0
  %748 = vmatpush1.bf16.msra.mxu0 0
  %749 = vmatprep.mubr.bf16.mxu0 0
  %750 = vmatmul.mubr.bf16.gmra.mrb[0].mxu0 %v482
  %v751 = vpop.f32.mrb[0].mxu0
  %v752 = vadd.f32 %v711, %v751
  %v753 = vpop.f32.mrb[0].mxu0
  %v754 = vpop.f32.mrb[0].mxu0
  %v755 = vadd.f32 %v714, %v754
  %v756 = vpop.f32.mrb[0].mxu0
  %757 = vdwg.mxu0
  %v758 = vld [vmem:[%s5] sm:$0x1]
  %v759 = vlaneseq
  %v760 = vshrl.u32 %v759, 7
  %v761 = vsub.s32 0, %v760
  %v762 = vrot.slane %v758, %v761
  %v763 = vmul.f32 %v752, %v762
  %v764 = vmul.f32 %v755, %v762
  %v765 = vld [vmem:[%s5 + $0x1] sm:$0x1]
  %v766 = vlaneseq
  %v767 = vshrl.u32 %v766, 7
  %v768 = vsub.s32 0, %v767
  %v769 = vrot.slane %v765, %v768
  %v770 = vadd.f32 %v763, %v769
  %v771 = vadd.f32 %v764, %v769
  %v772 = vld [vmem:[%s1] sm:$0xff]
  %v773 = vld [vmem:[%s1 + $0x8] sm:$0xff]
  %v774 = vadd.f32 %v770, %v772
  %v775 = vadd.f32 %v771, %v773
  %vm776 = vcmp.ge.f32.partialorder %v774, 0.0
  %vm777 = vcmp.ge.f32.partialorder %v775, 0.0
  %v778 = vmul.f32 %v774, 0.2
  %v779 = vmul.f32 %v775, 0.2
  %v780 = vsel %vm776, %v774, %v778
  %v781 = vsel %vm777, %v775, %v779
  %782 = vst [vmem:[%s6] sm:$0xff] %v780
  %783 = vst [vmem:[%s6 + $0x8] sm:$0xff] %v781
  // Predicated region
  $region26: #{residual_block_encoder.3} parent=0 // pred_check
    _
  $region27: #{residual_block_encoder.3} parent=0 // pred_check_branch
    %785 = sbr.rel (0) target = $region29
  $region28: #{residual_block_encoder.3} parent=0 // pred_region
    _
  $region29: #{residual_block_encoder.3} parent=0 // pred_fallthru
    _
  // Predicated region
  $region30: #{residual_block_encoder.3} parent=0 // pred_check
    _
  $region31: #{residual_block_encoder.3} parent=0 // pred_check_branch
    %787 = sbr.rel (0) target = $region33
  $region32: #{residual_block_encoder.3} parent=0 // pred_region
    _
  $region33: #{residual_block_encoder.3} parent=0 // pred_fallthru
    _

</llo_original>
